<compile_context>
chip_gen: v7x
topology: tpu7x:2x2x1
jax: 0.10.0
libtpu: 0.0.40
codegen_flags: <defaults>
</compile_context>

<pallas_src>
import jax
import jax.numpy as jnp
from jax.experimental import pallas as pl
from jax.experimental.pallas import tpu as pltpu


# ---------------------------------------------------------------------------
# Fused kernel: per-batch attention + para-topic gate apply + head-concat +
# fc_out projection.  Blocks carry all H heads of one batch element.
# ---------------------------------------------------------------------------
def _fused_attn_fcout_kernel(gate_ref, q_ref, k_ref, v_ref, bias_ref,
                             w_out_ref, b_out_ref,
                             out_ref, weights_ref):
    q = q_ref[0]          # [H, Lq, Dk]
    k = k_ref[0]          # [H, Lk, Dk]
    v = v_ref[0]          # [H, Lk, Dv]
    bias = bias_ref[0]    # [H, Lq, Lk]
    gate = gate_ref[0]    # [H, Np]   (Np == Lk)

    H, _, Dk = q.shape
    Dv = v.shape[-1]

    scale = 1.0 / (Dk ** 0.5)

    # attn = (q / sqrt(d_k)) @ k^T + bias  — contract last dims, no explicit .T
    attn = jnp.einsum('hqd,hkd->hqk', q * scale, k,
                      preferred_element_type=jnp.float32) + bias

    # softmax over last axis (f32 throughout; reciprocal on the EUP slot)
    m = jnp.max(attn, axis=-1, keepdims=True)
    e = jnp.exp(attn - m)
    denom = jnp.sum(e, axis=-1, keepdims=True)
    weights = e * pl.reciprocal(denom, approx=True)

    # para-topic gate (precomputed in wrapper):  weights *= gate[h, None, :]
    weights = weights * gate[:, None, :]
    # TODO(synk): nn.Dropout is identity here (eval-mode semantics).

    weights_ref[0] = weights

    # context per head: [H, Lq, Dv]
    ctx = jnp.einsum('hqk,hkd->hqd', weights, v,
                     preferred_element_type=jnp.float32)

    # head-concat + fc_out folded together:
    #   out = concat_h(ctx_h) @ W_out + b_out = b_out + sum_h ctx_h @ W_out[hDv:(h+1)Dv]
    out = b_out_ref[...]                        # [1, d_model], broadcasts on first add
    for h in range(H):                          # static unroll, H is small
        out = out + jnp.dot(ctx[h], w_out_ref[pl.ds(h * Dv, Dv), :],
                            preferred_element_type=jnp.float32)
    out_ref[0] = out                            # lane-dense [Lq, d_model]


# ---------------------------------------------------------------------------
# Wrapper
# ---------------------------------------------------------------------------
def scaled_dot_product_attention_with_para_topic(q, k, v, pt_attn, bias, params):
    B, H, Lq, Dk = q.shape
    Lk = k.shape[2]
    Np = pt_attn.shape[2]
    Dv = v.shape[3]
    d_model = H * Dv

    # Same implicit requirement as the torch module's .view(B, H, 1, -1):
    assert Lk == Np, "para-topic gate requires len_k == n_paras"
    assert params["w_out"].shape == (d_model, d_model)

    # --- hoisted para-topic gate (tiny MLP, computed once for all B,H) ------
    # gate[b,h,p] = sigmoid(fc_pt_2(tanh(fc_pt_1(pt_attn[b,h,p,:]))))
    hpt = jnp.tanh(jnp.einsum('bhpd,dv->bhpv', pt_attn, params["w1"]) + params["b1"])
    gate = jax.nn.sigmoid(jnp.sum(hpt * params["w2"], axis=-1)
                          + params["b2"][0, 0])            # [B, H, Np]

    # TODO(synk): at non-toy sizes, cast MXU operands (q/k/v/ctx/w_out) to bf16
    # on v6e/v7x (keep f32 accumulation + f32 softmax) and tile w_out along its
    # output dim so the double-buffered weight fits v7x's 64 MiB VMEM.
    graph_out, weights = pl.pallas_call(
        _fused_attn_fcout_kernel,
        out_shape=(jax.ShapeDtypeStruct((B, Lq, d_model), jnp.float32),
                   jax.ShapeDtypeStruct((B, H, Lq, Lk), jnp.float32)),
        grid=(B,),
        in_specs=[
            pl.BlockSpec((1, H, Np), lambda b: (b, 0, 0)),         # gate
            pl.BlockSpec((1, H, Lq, Dk), lambda b: (b, 0, 0, 0)),  # q
            pl.BlockSpec((1, H, Lk, Dk), lambda b: (b, 0, 0, 0)),  # k
            pl.BlockSpec((1, H, Lk, Dv), lambda b: (b, 0, 0, 0)),  # v
            pl.BlockSpec((1, H, Lq, Lk), lambda b: (b, 0, 0, 0)),  # bias
            pl.BlockSpec((d_model, d_model), lambda b: (0, 0)),    # fc_out weight (in, out)
            pl.BlockSpec((1, d_model), lambda b: (0, 0)),          # fc_out bias
        ],
        out_specs=(pl.BlockSpec((1, Lq, d_model), lambda b: (b, 0, 0)),
                   pl.BlockSpec((1, H, Lq, Lk), lambda b: (b, 0, 0, 0))),
        compiler_params=pltpu.CompilerParams(
            dimension_semantics=("parallel",)),
    )(gate, q, k, v, bias, params["w_out"], params["b_out"])

    return graph_out, weights


# ---------------------------------------------------------------------------
# Pure-JAX reference (mirrors the PyTorch forward, eval-mode dropout)
# ---------------------------------------------------------------------------
def _reference(q, k, v, pt_attn, bias, params):
    B, H, Lq, Dk = q.shape
    attn = jnp.einsum('bhqd,bhkd->bhqk', q / (Dk ** 0.5), k) + bias
    weights = jax.nn.softmax(attn, axis=-1)
    h = jnp.tanh(pt_attn @ params["w1"] + params["b1"])
    gate = jax.nn.sigmoid(jnp.sum(h * params["w2"], axis=-1, keepdims=True)
                          + params["b2"][0, 0])            # [B,H,Np,1]
    weights = weights * gate.reshape(B, H, 1, -1)
    go = weights @ v                                       # [B,H,Lq,Dv]
    Dv = go.shape[-1]
    x = jnp.transpose(go, (0, 2, 1, 3)).reshape(B, Lq, H * Dv)
    out = x @ params["w_out"] + params["b_out"]
    return out, weights


if __name__ == "__main__":
    # Small shapes consistent with the module:
    #   len_q = len_k = len_v = n_paras = 8, dim_per_head = d_k = d_v = 8,
    #   d_model = n_heads * dim_per_head = 32.
    B, H, L, Dk = 2, 4, 8, 8
    Dv = Dk
    d_model = H * Dk

    key = jax.random.PRNGKey(0)
    ks = jax.random.split(key, 12)

    q = jax.random.normal(ks[0], (B, H, L, Dk), jnp.float32)
    k = jax.random.normal(ks[1], (B, H, L, Dk), jnp.float32)
    v = jax.random.normal(ks[2], (B, H, L, Dv), jnp.float32)
    pt_attn = jax.random.normal(ks[3], (B, H, L, Dk), jnp.float32)
    bias = 0.1 * jax.random.normal(ks[4], (B, H, L, L), jnp.float32)

    # Deterministic parameter init (shapes from nn.Linear definitions, (in, out)).
    params = {
        "w1": 0.1 * jax.random.normal(ks[5], (Dk, Dv), jnp.float32),      # fc_pt_1
        "b1": 0.1 * jax.random.normal(ks[6], (1, Dv), jnp.float32),
        "w2": 0.1 * jax.random.normal(ks[7], (1, Dv), jnp.float32),       # fc_pt_2 weight (1, d_v)
        "b2": 0.1 * jax.random.normal(ks[8], (1, 1), jnp.float32),
        "w_out": 0.1 * jax.random.normal(ks[9], (d_model, d_model), jnp.float32),
        "b_out": 0.1 * jax.random.normal(ks[10], (1, d_model), jnp.float32),
    }

    graph_out, weights = scaled_dot_product_attention_with_para_topic(
        q, k, v, pt_attn, bias, params)
    jax.block_until_ready((graph_out, weights))

    ref_out, ref_w = _reference(q, k, v, pt_attn, bias, params)
    # Tolerances account for the approximate EUP reciprocal in the softmax.
    assert jnp.allclose(graph_out, ref_out, atol=2e-3, rtol=2e-3)
    assert jnp.allclose(weights, ref_w, atol=1e-3, rtol=1e-3)

    print("KERNEL_OK")
</pallas_src>

<mosaic_0001>
module attributes {stable_mosaic.version = 11 : i64} {
  func.func @_fused_attn_fcout_kernel(%arg0: i32, %arg1: memref<1x4x8xf32, #tpu.memory_space<vmem>>, %arg2: memref<1x4x8x8xf32, #tpu.memory_space<vmem>>, %arg3: memref<1x4x8x8xf32, #tpu.memory_space<vmem>>, %arg4: memref<1x4x8x8xf32, #tpu.memory_space<vmem>>, %arg5: memref<1x4x8x8xf32, #tpu.memory_space<vmem>>, %arg6: memref<32x32xf32, #tpu.memory_space<vmem>>, %arg7: memref<1x32xf32, #tpu.memory_space<vmem>>, %arg8: memref<1x8x32xf32, #tpu.memory_space<vmem>>, %arg9: memref<1x4x8x8xf32, #tpu.memory_space<vmem>>) attributes {dimension_semantics = [#tpu.dimension_semantics<parallel>], iteration_bounds = array<i64: 2>, scalar_prefetch = 0 : i64, scratch_operands = 0 : i64, tpu.core_type = #tpu.core_type<tc>, window_params = [{transform_indices = @transform_0, window_bounds = array<i64: 1, 4, 8>}, {transform_indices = @transform_1, window_bounds = array<i64: 1, 4, 8, 8>}, {transform_indices = @transform_2, window_bounds = array<i64: 1, 4, 8, 8>}, {transform_indices = @transform_3, window_bounds = array<i64: 1, 4, 8, 8>}, {transform_indices = @transform_4, window_bounds = array<i64: 1, 4, 8, 8>}, {pipeline_mode = #tpu.pipeline_mode<synchronous>, transform_indices = @transform_5, window_bounds = array<i64: 32, 32>}, {pipeline_mode = #tpu.pipeline_mode<synchronous>, transform_indices = @transform_6, window_bounds = array<i64: 1, 32>}, {transform_indices = @transform_7, window_bounds = array<i64: 1, 8, 32>}, {transform_indices = @transform_8, window_bounds = array<i64: 1, 4, 8, 8>}]} {
    %c0 = arith.constant 0 : index
    %c0_0 = arith.constant 0 : index
    %c0_1 = arith.constant 0 : index
    %c0_2 = arith.constant 0 : index
    %0 = vector.load %arg2[%c0, %c0_0, %c0_1, %c0_2] : memref<1x4x8x8xf32, #tpu.memory_space<vmem>>, vector<1x4x8x8xf32>
    %1 = vector.shape_cast %0 : vector<1x4x8x8xf32> to vector<4x8x8xf32>
    %c0_3 = arith.constant 0 : index
    %c0_4 = arith.constant 0 : index
    %c0_5 = arith.constant 0 : index
    %c0_6 = arith.constant 0 : index
    %2 = vector.load %arg3[%c0_3, %c0_4, %c0_5, %c0_6] : memref<1x4x8x8xf32, #tpu.memory_space<vmem>>, vector<1x4x8x8xf32>
    %3 = vector.shape_cast %2 : vector<1x4x8x8xf32> to vector<4x8x8xf32>
    %c0_7 = arith.constant 0 : index
    %c0_8 = arith.constant 0 : index
    %c0_9 = arith.constant 0 : index
    %c0_10 = arith.constant 0 : index
    %4 = vector.load %arg4[%c0_7, %c0_8, %c0_9, %c0_10] : memref<1x4x8x8xf32, #tpu.memory_space<vmem>>, vector<1x4x8x8xf32>
    %5 = vector.shape_cast %4 : vector<1x4x8x8xf32> to vector<4x8x8xf32>
    %c0_11 = arith.constant 0 : index
    %c0_12 = arith.constant 0 : index
    %c0_13 = arith.constant 0 : index
    %c0_14 = arith.constant 0 : index
    %6 = vector.load %arg5[%c0_11, %c0_12, %c0_13, %c0_14] : memref<1x4x8x8xf32, #tpu.memory_space<vmem>>, vector<1x4x8x8xf32>
    %7 = vector.shape_cast %6 : vector<1x4x8x8xf32> to vector<4x8x8xf32>
    %c0_15 = arith.constant 0 : index
    %c0_16 = arith.constant 0 : index
    %c0_17 = arith.constant 0 : index
    %8 = vector.load %arg1[%c0_15, %c0_16, %c0_17] : memref<1x4x8xf32, #tpu.memory_space<vmem>>, vector<1x4x8xf32>
    %9 = vector.shape_cast %8 : vector<1x4x8xf32> to vector<4x8xf32>
    %cst = arith.constant 0.353553385 : f32
    %10 = vector.broadcast %cst : f32 to vector<4x8x8xf32>
    %11 = arith.mulf %1, %10 : vector<4x8x8xf32>
    "tpu.trace_start"() <{level = 10 : i32, message = "hqd,hkd->hqk"}> : () -> ()
    %cst_18 = arith.constant dense<0.000000e+00> : vector<4x8x8xf32>
    %12 = tpu.matmul %11, %3, %cst_18 {dimension_numbers = #tpu.dot_dimension_numbers<[2], [2], [1], [1], [0, 0, 0, 1, 1, 1], [0], [0]>} : vector<4x8x8xf32>, vector<4x8x8xf32>, vector<4x8x8xf32> -> vector<4x8x8xf32>
    "tpu.trace_stop"() : () -> ()
    %13 = arith.addf %12, %7 : vector<4x8x8xf32>
    %cst_19 = arith.constant dense<0xFF800000> : vector<4x8xf32>
    %14 = vector.multi_reduction <maximumf>, %13, %cst_19 [2] : vector<4x8x8xf32> to vector<4x8xf32>
    %15 = vector.shape_cast %14 : vector<4x8xf32> to vector<4x8x1xf32>
    %16 = vector.broadcast %15 : vector<4x8x1xf32> to vector<4x8x8xf32>
    %17 = arith.subf %13, %16 : vector<4x8x8xf32>
    %18 = math.exp %17 : vector<4x8x8xf32>
    %cst_20 = arith.constant dense<0.000000e+00> : vector<4x8xf32>
    %19 = vector.multi_reduction <add>, %18, %cst_20 [2] : vector<4x8x8xf32> to vector<4x8xf32>
    %20 = vector.shape_cast %19 : vector<4x8xf32> to vector<4x8x1xf32>
    %21 = tpu.reciprocal %20 {approx = true} : vector<4x8x1xf32> -> vector<4x8x1xf32>
    %22 = vector.broadcast %21 : vector<4x8x1xf32> to vector<4x8x8xf32>
    %23 = arith.mulf %18, %22 : vector<4x8x8xf32>
    %24 = vector.shape_cast %9 : vector<4x8xf32> to vector<4x1x8xf32>
    %25 = vector.broadcast %24 : vector<4x1x8xf32> to vector<4x8x8xf32>
    %26 = arith.mulf %23, %25 : vector<4x8x8xf32>
    %c0_21 = arith.constant 0 : index
    %c0_22 = arith.constant 0 : index
    %c0_23 = arith.constant 0 : index
    %c0_24 = arith.constant 0 : index
    %27 = vector.load %arg9[%c0_21, %c0_22, %c0_23, %c0_24] : memref<1x4x8x8xf32, #tpu.memory_space<vmem>>, vector<1x4x8x8xf32>
    %28 = vector.shape_cast %27 : vector<1x4x8x8xf32> to vector<4x8x8xf32>
    %29 = vector.shape_cast %26 : vector<4x8x8xf32> to vector<1x4x8x8xf32>
    tpu.vector_store %arg9[%c0_21, %c0_22, %c0_23, %c0_24], %29 {strides = array<i32>} : memref<1x4x8x8xf32, #tpu.memory_space<vmem>>, vector<1x4x8x8xf32>,
    "tpu.trace_start"() <{level = 10 : i32, message = "hqk,hkd->hqd"}> : () -> ()
    %cst_25 = arith.constant dense<0.000000e+00> : vector<4x8x8xf32>
    %30 = tpu.matmul %26, %5, %cst_25 {dimension_numbers = #tpu.dot_dimension_numbers<[2], [1], [1], [2], [0, 0, 0, 1, 1, 2], [0], [0]>} : vector<4x8x8xf32>, vector<4x8x8xf32>, vector<4x8x8xf32> -> vector<4x8x8xf32>
    "tpu.trace_stop"() : () -> ()
    %c0_26 = arith.constant 0 : index
    %c0_27 = arith.constant 0 : index
    %31 = vector.load %arg7[%c0_26, %c0_27] : memref<1x32xf32, #tpu.memory_space<vmem>>, vector<1x32xf32>
    %32 = vector.extract_strided_slice %30 {offsets = [0, 0, 0], sizes = [1, 8, 8], strides = [1, 1, 1]} : vector<4x8x8xf32> to vector<1x8x8xf32>
    %33 = vector.shape_cast %32 : vector<1x8x8xf32> to vector<8x8xf32>
    %c0_28 = arith.constant 0 : index
    %c0_29 = arith.constant 0 : index
    %34 = vector.load %arg6[%c0_28, %c0_29] : memref<32x32xf32, #tpu.memory_space<vmem>>, vector<8x32xf32>
    %cst_30 = arith.constant dense<0.000000e+00> : vector<8x32xf32>
    %35 = tpu.matmul %33, %34, %cst_30 {dimension_numbers = #tpu.dot_dimension_numbers<[1], [0], [0], [1], [0, 0, 1, 1], [], []>} : vector<8x8xf32>, vector<8x32xf32>, vector<8x32xf32> -> vector<8x32xf32>
    %36 = vector.broadcast %31 : vector<1x32xf32> to vector<8x32xf32>
    %37 = arith.addf %36, %35 : vector<8x32xf32>
    %38 = vector.extract_strided_slice %30 {offsets = [1, 0, 0], sizes = [1, 8, 8], strides = [1, 1, 1]} : vector<4x8x8xf32> to vector<1x8x8xf32>
    %39 = vector.shape_cast %38 : vector<1x8x8xf32> to vector<8x8xf32>
    %c8 = arith.constant 8 : index
    %c0_31 = arith.constant 0 : index
    %40 = vector.load %arg6[%c8, %c0_31] : memref<32x32xf32, #tpu.memory_space<vmem>>, vector<8x32xf32>
    %cst_32 = arith.constant dense<0.000000e+00> : vector<8x32xf32>
    %41 = tpu.matmul %39, %40, %cst_32 {dimension_numbers = #tpu.dot_dimension_numbers<[1], [0], [0], [1], [0, 0, 1, 1], [], []>} : vector<8x8xf32>, vector<8x32xf32>, vector<8x32xf32> -> vector<8x32xf32>
    %42 = arith.addf %37, %41 : vector<8x32xf32>
    %43 = vector.extract_strided_slice %30 {offsets = [2, 0, 0], sizes = [1, 8, 8], strides = [1, 1, 1]} : vector<4x8x8xf32> to vector<1x8x8xf32>
    %44 = vector.shape_cast %43 : vector<1x8x8xf32> to vector<8x8xf32>
    %c16 = arith.constant 16 : index
    %c0_33 = arith.constant 0 : index
    %45 = vector.load %arg6[%c16, %c0_33] : memref<32x32xf32, #tpu.memory_space<vmem>>, vector<8x32xf32>
    %cst_34 = arith.constant dense<0.000000e+00> : vector<8x32xf32>
    %46 = tpu.matmul %44, %45, %cst_34 {dimension_numbers = #tpu.dot_dimension_numbers<[1], [0], [0], [1], [0, 0, 1, 1], [], []>} : vector<8x8xf32>, vector<8x32xf32>, vector<8x32xf32> -> vector<8x32xf32>
    %47 = arith.addf %42, %46 : vector<8x32xf32>
    %48 = vector.extract_strided_slice %30 {offsets = [3, 0, 0], sizes = [1, 8, 8], strides = [1, 1, 1]} : vector<4x8x8xf32> to vector<1x8x8xf32>
    %49 = vector.shape_cast %48 : vector<1x8x8xf32> to vector<8x8xf32>
    %c24 = arith.constant 24 : index
    %c0_35 = arith.constant 0 : index
    %50 = vector.load %arg6[%c24, %c0_35] : memref<32x32xf32, #tpu.memory_space<vmem>>, vector<8x32xf32>
    %cst_36 = arith.constant dense<0.000000e+00> : vector<8x32xf32>
    %51 = tpu.matmul %49, %50, %cst_36 {dimension_numbers = #tpu.dot_dimension_numbers<[1], [0], [0], [1], [0, 0, 1, 1], [], []>} : vector<8x8xf32>, vector<8x32xf32>, vector<8x32xf32> -> vector<8x32xf32>
    %52 = arith.addf %47, %51 : vector<8x32xf32>
    %c0_37 = arith.constant 0 : index
    %c0_38 = arith.constant 0 : index
    %c0_39 = arith.constant 0 : index
    %53 = vector.load %arg8[%c0_37, %c0_38, %c0_39] : memref<1x8x32xf32, #tpu.memory_space<vmem>>, vector<1x8x32xf32>
    %54 = vector.shape_cast %53 : vector<1x8x32xf32> to vector<8x32xf32>
    %55 = vector.shape_cast %52 : vector<8x32xf32> to vector<1x8x32xf32>
    tpu.vector_store %arg8[%c0_37, %c0_38, %c0_39], %55 {strides = array<i32>} : memref<1x8x32xf32, #tpu.memory_space<vmem>>, vector<1x8x32xf32>,
    return
  }
  func.func @transform_0(%arg0: i32) -> (i32, i32, i32) {
    %c0_i32 = arith.constant 0 : i32
    %c0_i32_0 = arith.constant 0 : i32
    %c0_i32_1 = arith.constant 0 : i32
    return %arg0, %c0_i32, %c0_i32_0 : i32, i32, i32
  }
  func.func @transform_1(%arg0: i32) -> (i32, i32, i32, i32) {
    %c0_i32 = arith.constant 0 : i32
    %c0_i32_0 = arith.constant 0 : i32
    %c0_i32_1 = arith.constant 0 : i32
    %c0_i32_2 = arith.constant 0 : i32
    return %arg0, %c0_i32, %c0_i32_0, %c0_i32_1 : i32, i32, i32, i32
  }
  func.func @transform_2(%arg0: i32) -> (i32, i32, i32, i32) {
    %c0_i32 = arith.constant 0 : i32
    %c0_i32_0 = arith.constant 0 : i32
    %c0_i32_1 = arith.constant 0 : i32
    %c0_i32_2 = arith.constant 0 : i32
    return %arg0, %c0_i32, %c0_i32_0, %c0_i32_1 : i32, i32, i32, i32
  }
  func.func @transform_3(%arg0: i32) -> (i32, i32, i32, i32) {
    %c0_i32 = arith.constant 0 : i32
    %c0_i32_0 = arith.constant 0 : i32
    %c0_i32_1 = arith.constant 0 : i32
    %c0_i32_2 = arith.constant 0 : i32
    return %arg0, %c0_i32, %c0_i32_0, %c0_i32_1 : i32, i32, i32, i32
  }
  func.func @transform_4(%arg0: i32) -> (i32, i32, i32, i32) {
    %c0_i32 = arith.constant 0 : i32
    %c0_i32_0 = arith.constant 0 : i32
    %c0_i32_1 = arith.constant 0 : i32
    %c0_i32_2 = arith.constant 0 : i32
    return %arg0, %c0_i32, %c0_i32_0, %c0_i32_1 : i32, i32, i32, i32
  }
  func.func @transform_5(%arg0: i32) -> (i32, i32) {
    %c0_i32 = arith.constant 0 : i32
    %c0_i32_0 = arith.constant 0 : i32
    %c0_i32_1 = arith.constant 0 : i32
    return %c0_i32, %c0_i32_0 : i32, i32
  }
  func.func @transform_6(%arg0: i32) -> (i32, i32) {
    %c0_i32 = arith.constant 0 : i32
    %c0_i32_0 = arith.constant 0 : i32
    %c0_i32_1 = arith.constant 0 : i32
    return %c0_i32, %c0_i32_0 : i32, i32
  }
  func.func @transform_7(%arg0: i32) -> (i32, i32, i32) {
    %c0_i32 = arith.constant 0 : i32
    %c0_i32_0 = arith.constant 0 : i32
    %c0_i32_1 = arith.constant 0 : i32
    return %arg0, %c0_i32, %c0_i32_0 : i32, i32, i32
  }
  func.func @transform_8(%arg0: i32) -> (i32, i32, i32, i32) {
    %c0_i32 = arith.constant 0 : i32
    %c0_i32_0 = arith.constant 0 : i32
    %c0_i32_1 = arith.constant 0 : i32
    %c0_i32_2 = arith.constant 0 : i32
    return %arg0, %c0_i32, %c0_i32_0, %c0_i32_1 : i32, i32, i32, i32
  }
}

</mosaic_0001>

<llo_original>
// kernel: tpu_custom_call.1
$region0: #{tpu_custom_call.1}
  #allocation0 [shape = 'u32[]', space=smem, size = 0x4, offset = 0x4, fixed_abs, tag = 'smem constant byte address 0x4 - core index']
  #allocation1 [shape = 'u32[144,128]{1,0:T(1,128)}', space=vmem, size = 0x12000, scoped, tag = 'internal scratch']
  %s0 = inlined_call_operand.hbm [shape: f32[2,4,8], index: 0, kind: input, shape index: {}]
  %s1 = inlined_call_operand.hbm [shape: f32[2,4,8,8], index: 1, kind: input, shape index: {}]
  %s2 = inlined_call_operand.hbm [shape: f32[2,4,8,8], index: 2, kind: input, shape index: {}]
  %s3 = inlined_call_operand.hbm [shape: f32[2,4,8,8], index: 3, kind: input, shape index: {}]
  %s4 = inlined_call_operand.hbm [shape: f32[2,4,8,8], index: 4, kind: input, shape index: {}]
  %s5 = inlined_call_operand.hbm [shape: f32[32,32], index: 5, kind: input, shape index: {}]
  %s6 = inlined_call_operand.vmem [shape: f32[1,32], index: 6, kind: input, shape index: {}]
  %s7 = inlined_call_operand.hbm [shape: f32[2,8,32], index: 7, kind: output, shape index: {0}]
  %s8 = inlined_call_operand.hbm [shape: f32[2,4,8,8], index: 8, kind: output, shape index: {1}]
  %9 = xla_tuple %s7, %s8
  %s10 = sld [smem:[#allocation0]]
  $region93: #{tpu_custom_call.1} parent=0
    _
  %s12 = ssub.s32 1, %s10
  %s13 = scalar_select 0, %s12, %s10
  $region1: #{tpu_custom_call.1} parent=0
    #allocation2 [shape = 'u8[4096]{0}', space=vmem, size = 0x1000, scoped, tag = 'input window, operand 0']
    #allocation3 [shape = 's32[2]{0}', space=sflag, size = 0x8, scoped, tag = 'scoped memory for tpu_custom_call.1']
    #allocation4 [shape = 's32[2]{0}', space=sflag, size = 0x8, scoped, tag = 'scoped memory for tpu_custom_call.1']
    #allocation5 [shape = 'u8[32768]{0}', space=vmem, size = 0x8000, scoped, tag = 'input window, operand 1']
    #allocation6 [shape = 's32[2]{0}', space=sflag, size = 0x8, scoped, tag = 'scoped memory for tpu_custom_call.1']
    #allocation7 [shape = 'u8[32768]{0}', space=vmem, size = 0x8000, scoped, tag = 'input window, operand 2']
    #allocation8 [shape = 'u8[32768]{0}', space=vmem, size = 0x8000, scoped, tag = 'input window, operand 3']
    #allocation9 [shape = 's32[2]{0}', space=sflag, size = 0x8, scoped, tag = 'scoped memory for tpu_custom_call.1']
    #allocation10 [shape = 'u8[32768]{0}', space=vmem, size = 0x8000, scoped, tag = 'input window, operand 4']
    #allocation11 [shape = 'u8[16384]{0}', space=vmem, size = 0x4000, scoped, tag = 'input window, operand 5, single buffered']
    #allocation12 [shape = 's32[1]{0}', space=sflag, size = 0x4, scoped, tag = 'scoped memory for tpu_custom_call.1']
    #allocation13 [shape = 'u8[8192]{0}', space=vmem, size = 0x2000, scoped, tag = 'output window, operand 0']
    #allocation14 [shape = 'u8[32768]{0}', space=vmem, size = 0x8000, scoped, tag = 'output window, operand 1']
    #allocation15 [shape = 's32[2]{0}', space=sflag, size = 0x8, scoped, tag = 'scoped memory for tpu_custom_call.1']
    %14 = vsyncpa [#allocation3], 0
    %s15 = scalar_lea.sflag [#allocation3], 1
    %16 = vsyncpa %s15, 0
    %17 = vsyncpa [#allocation6], 0
    %s18 = scalar_lea.sflag [#allocation6], 1
    %19 = vsyncpa %s18, 0
    %20 = vsyncpa [#allocation9], 0
    %s21 = scalar_lea.sflag [#allocation9], 1
    %22 = vsyncpa %s21, 0
    %23 = vsyncpa [#allocation12], 0
    %24 = vsyncpa [#allocation4], 0
    %s25 = scalar_lea.sflag [#allocation4], 1
    %26 = vsyncpa %s25, 0
    %27 = vsyncpa [#allocation15], 0
    %s28 = scalar_lea.sflag [#allocation15], 1
    %29 = vsyncpa %s28, 0
    loop: start=0, step=1, limit=4
    $region2: #{tpu_custom_call.1} parent=1 // loop_pre_header
      _
    $region3: #{tpu_custom_call.1} parent=1 // loop_header
      %s31 = sphi 0, %s35
      %p32 = scmp.ge.s32.totalorder %s31, 4
      %s41 = sphi 0, %s43
      %s44 = sphi 0, %s41
      %s45 = sphi 0, %s44
      %s61 = sphi 0, %s45
      %s67 = sphi 0, %s69
      %s70 = sphi 0, %s67
      %s71 = sphi 0, %s70
      %s87 = sphi 0, %s71
      %s93 = sphi 0, %s95
      %s96 = sphi 0, %s93
      %s97 = sphi 0, %s96
      %s113 = sphi 0, %s97
      %s119 = sphi 0, %s121
      %s122 = sphi 0, %s119
      %s123 = sphi 0, %s122
      %s139 = sphi 0, %s123
      %s145 = sphi 0, %s147
      %s148 = sphi 0, %s145
      %s149 = sphi 0, %s148
      %s165 = sphi 0, %s149
      %s169 = sphi 0, %s169
      %s171 = sphi 0, %s169
      %s172 = sphi 0, %s171
      %s186 = sphi 0, %s172
      %s190 = sphi 0, %s190
      %s192 = sphi 0, %s190
      %s193 = sphi 0, %s192
      %s207 = sphi 0, %s193
      %s213 = sphi 0, %s215
      %s216 = sphi 0, %s213
      %s217 = sphi 0, %s216
      %s233 = sphi 0, %s217
      %s239 = sphi 0, %s241
      %s242 = sphi 0, %s239
      %s243 = sphi 0, %s242
      %s259 = sphi 0, %s243
    $region4: #{tpu_custom_call.1} parent=1 // loop_header_branch
      %34 = sbr.rel (%p32) target = $region8
    $region5: #{tpu_custom_call.1} parent=1 // loop_body
      %s36 = ssub.s32 %s31, 1
      %s37 = ssub.s32 %s31, 2
      %s38 = sadd.s32 %s31, 1
      %s39 = ssub.s32 %s31, %s38
      %p40 = scmp.eq.s32.totalorder %s39, 0
      %s42 = sadd.s32 %s41, 1
      %s43 = scalar_select %p40, %s41, %s42
      %p46 = pneg %p40
      %p47 = scmp.eq.s32.totalorder %s31, 1
      %p48 = por %p46, %p47
      %p49 = scmp.ne.s32.totalorder %s41, %s44
      %p50 = scmp.eq.s32.totalorder %s31, 0
      %p51 = por %p49, %p50
      %p52 = scmp.ne.s32.totalorder %s41, %s44
      %p53 = scmp.eq.s32.totalorder %s36, 1
      %p54 = por %p52, %p53
      %p55 = scmp.ne.s32.totalorder %s44, %s45
      %p56 = scmp.eq.s32.totalorder %s36, 0
      %p57 = por %p55, %p56
      %p58 = scmp.ne.s32.totalorder %s44, %s45
      %p59 = scmp.eq.s32.totalorder %s37, 1
      %p60 = por %p58, %p59
      %p62 = scmp.ne.s32.totalorder %s45, %s61
      %p63 = scmp.eq.s32.totalorder %s37, 0
      %p64 = por %p62, %p63
      %s65 = ssub.s32 %s31, %s38
      %p66 = scmp.eq.s32.totalorder %s65, 0
      %s68 = sadd.s32 %s67, 1
      %s69 = scalar_select %p66, %s67, %s68
      %p72 = pneg %p66
      %p73 = scmp.eq.s32.totalorder %s31, 1
      %p74 = por %p72, %p73
      %p75 = scmp.ne.s32.totalorder %s67, %s70
      %p76 = scmp.eq.s32.totalorder %s31, 0
      %p77 = por %p75, %p76
      %p78 = scmp.ne.s32.totalorder %s67, %s70
      %p79 = scmp.eq.s32.totalorder %s36, 1
      %p80 = por %p78, %p79
      %p81 = scmp.ne.s32.totalorder %s70, %s71
      %p82 = scmp.eq.s32.totalorder %s36, 0
      %p83 = por %p81, %p82
      %p84 = scmp.ne.s32.totalorder %s70, %s71
      %p85 = scmp.eq.s32.totalorder %s37, 1
      %p86 = por %p84, %p85
      %p88 = scmp.ne.s32.totalorder %s71, %s87
      %p89 = scmp.eq.s32.totalorder %s37, 0
      %p90 = por %p88, %p89
      %s91 = ssub.s32 %s31, %s38
      %p92 = scmp.eq.s32.totalorder %s91, 0
      %s94 = sadd.s32 %s93, 1
      %s95 = scalar_select %p92, %s93, %s94
      %p98 = pneg %p92
      %p99 = scmp.eq.s32.totalorder %s31, 1
      %p100 = por %p98, %p99
      %p101 = scmp.ne.s32.totalorder %s93, %s96
      %p102 = scmp.eq.s32.totalorder %s31, 0
      %p103 = por %p101, %p102
      %p104 = scmp.ne.s32.totalorder %s93, %s96
      %p105 = scmp.eq.s32.totalorder %s36, 1
      %p106 = por %p104, %p105
      %p107 = scmp.ne.s32.totalorder %s96, %s97
      %p108 = scmp.eq.s32.totalorder %s36, 0
      %p109 = por %p107, %p108
      %p110 = scmp.ne.s32.totalorder %s96, %s97
      %p111 = scmp.eq.s32.totalorder %s37, 1
      %p112 = por %p110, %p111
      %p114 = scmp.ne.s32.totalorder %s97, %s113
      %p115 = scmp.eq.s32.totalorder %s37, 0
      %p116 = por %p114, %p115
      %s117 = ssub.s32 %s31, %s38
      %p118 = scmp.eq.s32.totalorder %s117, 0
      %s120 = sadd.s32 %s119, 1
      %s121 = scalar_select %p118, %s119, %s120
      %p124 = pneg %p118
      %p125 = scmp.eq.s32.totalorder %s31, 1
      %p126 = por %p124, %p125
      %p127 = scmp.ne.s32.totalorder %s119, %s122
      %p128 = scmp.eq.s32.totalorder %s31, 0
      %p129 = por %p127, %p128
      %p130 = scmp.ne.s32.totalorder %s119, %s122
      %p131 = scmp.eq.s32.totalorder %s36, 1
      %p132 = por %p130, %p131
      %p133 = scmp.ne.s32.totalorder %s122, %s123
      %p134 = scmp.eq.s32.totalorder %s36, 0
      %p135 = por %p133, %p134
      %p136 = scmp.ne.s32.totalorder %s122, %s123
      %p137 = scmp.eq.s32.totalorder %s37, 1
      %p138 = por %p136, %p137
      %p140 = scmp.ne.s32.totalorder %s123, %s139
      %p141 = scmp.eq.s32.totalorder %s37, 0
      %p142 = por %p140, %p141
      %s143 = ssub.s32 %s31, %s38
      %p144 = scmp.eq.s32.totalorder %s143, 0
      %s146 = sadd.s32 %s145, 1
      %s147 = scalar_select %p144, %s145, %s146
      %p150 = pneg %p144
      %p151 = scmp.eq.s32.totalorder %s31, 1
      %p152 = por %p150, %p151
      %p153 = scmp.ne.s32.totalorder %s145, %s148
      %p154 = scmp.eq.s32.totalorder %s31, 0
      %p155 = por %p153, %p154
      %p156 = scmp.ne.s32.totalorder %s145, %s148
      %p157 = scmp.eq.s32.totalorder %s36, 1
      %p158 = por %p156, %p157
      %p159 = scmp.ne.s32.totalorder %s148, %s149
      %p160 = scmp.eq.s32.totalorder %s36, 0
      %p161 = por %p159, %p160
      %p162 = scmp.ne.s32.totalorder %s148, %s149
      %p163 = scmp.eq.s32.totalorder %s37, 1
      %p164 = por %p162, %p163
      %p166 = scmp.ne.s32.totalorder %s149, %s165
      %p167 = scmp.eq.s32.totalorder %s37, 0
      %p168 = por %p166, %p167
      %s170 = sadd.s32 %s169, 1
      %p173 = scmp.eq.s32.totalorder %s31, 1
      %p174 = scmp.ne.s32.totalorder %s169, %s171
      %p175 = scmp.eq.s32.totalorder %s31, 0
      %p176 = por %p174, %p175
      %p177 = scmp.ne.s32.totalorder %s169, %s171
      %p178 = scmp.eq.s32.totalorder %s36, 1
      %p179 = por %p177, %p178
      %p180 = scmp.ne.s32.totalorder %s171, %s172
      %p181 = scmp.eq.s32.totalorder %s36, 0
      %p182 = por %p180, %p181
      %p183 = scmp.ne.s32.totalorder %s171, %s172
      %p184 = scmp.eq.s32.totalorder %s37, 1
      %p185 = por %p183, %p184
      %p187 = scmp.ne.s32.totalorder %s172, %s186
      %p188 = scmp.eq.s32.totalorder %s37, 0
      %p189 = por %p187, %p188
      %s191 = sadd.s32 %s190, 1
      %p194 = scmp.eq.s32.totalorder %s31, 1
      %p195 = scmp.ne.s32.totalorder %s190, %s192
      %p196 = scmp.eq.s32.totalorder %s31, 0
      %p197 = por %p195, %p196
      %p198 = scmp.ne.s32.totalorder %s190, %s192
      %p199 = scmp.eq.s32.totalorder %s36, 1
      %p200 = por %p198, %p199
      %p201 = scmp.ne.s32.totalorder %s192, %s193
      %p202 = scmp.eq.s32.totalorder %s36, 0
      %p203 = por %p201, %p202
      %p204 = scmp.ne.s32.totalorder %s192, %s193
      %p205 = scmp.eq.s32.totalorder %s37, 1
      %p206 = por %p204, %p205
      %p208 = scmp.ne.s32.totalorder %s193, %s207
      %p209 = scmp.eq.s32.totalorder %s37, 0
      %p210 = por %p208, %p209
      %s211 = ssub.s32 %s31, %s38
      %p212 = scmp.eq.s32.totalorder %s211, 0
      %s214 = sadd.s32 %s213, 1
      %s215 = scalar_select %p212, %s213, %s214
      %p218 = pneg %p212
      %p219 = scmp.eq.s32.totalorder %s31, 1
      %p220 = por %p218, %p219
      %p221 = scmp.ne.s32.totalorder %s213, %s216
      %p222 = scmp.eq.s32.totalorder %s31, 0
      %p223 = por %p221, %p222
      %p224 = scmp.ne.s32.totalorder %s213, %s216
      %p225 = scmp.eq.s32.totalorder %s36, 1
      %p226 = por %p224, %p225
      %p227 = scmp.ne.s32.totalorder %s216, %s217
      %p228 = scmp.eq.s32.totalorder %s36, 0
      %p229 = por %p227, %p228
      %p230 = scmp.ne.s32.totalorder %s216, %s217
      %p231 = scmp.eq.s32.totalorder %s37, 1
      %p232 = por %p230, %p231
      %p234 = scmp.ne.s32.totalorder %s217, %s233
      %p235 = scmp.eq.s32.totalorder %s37, 0
      %p236 = por %p234, %p235
      %s237 = ssub.s32 %s31, %s38
      %p238 = scmp.eq.s32.totalorder %s237, 0
      %s240 = sadd.s32 %s239, 1
      %s241 = scalar_select %p238, %s239, %s240
      %p244 = pneg %p238
      %p245 = scmp.eq.s32.totalorder %s31, 1
      %p246 = por %p244, %p245
      %p247 = scmp.ne.s32.totalorder %s239, %s242
      %p248 = scmp.eq.s32.totalorder %s31, 0
      %p249 = por %p247, %p248
      %p250 = scmp.ne.s32.totalorder %s239, %s242
      %p251 = scmp.eq.s32.totalorder %s36, 1
      %p252 = por %p250, %p251
      %p253 = scmp.ne.s32.totalorder %s242, %s243
      %p254 = scmp.eq.s32.totalorder %s36, 0
      %p255 = por %p253, %p254
      %p256 = scmp.ne.s32.totalorder %s242, %s243
      %p257 = scmp.eq.s32.totalorder %s37, 1
      %p258 = por %p256, %p257
      %p260 = scmp.ne.s32.totalorder %s243, %s259
      %p261 = scmp.eq.s32.totalorder %s37, 0
      %p262 = por %p260, %p261
      %p263 = scmp.le.s32.totalorder 1, %s31
      %p264 = scmp.lt.s32.totalorder %s31, 3
      %p265 = pnand %p263, %p264
      %p266 = pneg %p265
      // Predicated region
      $region9: #{tpu_custom_call.1} parent=5 // pred_check
        _
      $region10: #{tpu_custom_call.1} parent=5 // pred_check_branch
        %268 = sbr.rel (%p265) target = $region12
      $region11: #{tpu_custom_call.1} parent=5 // pred_region
        %s269 = ssub.s32 %s31, 1
        // Predicated region
        $region13: #{tpu_custom_call.1} parent=11 // pred_check
          %p270 = pneg %p182
        $region14: #{tpu_custom_call.1} parent=11 // pred_check_branch
          %272 = sbr.rel (%p270) target = $region16
        $region15: #{tpu_custom_call.1} parent=11 // pred_region
          %s274 = ssub.s32 512, 512
          %275 = vsyncadd [#allocation12], %s274
          %s276 = sshll.u32 [#allocation11], 4
          %s277 = int_to_ptr.vmem [resolvable:$true] %s276
          %282 = dma.hbm_to_vmem [thread:$0]  %s5, 512, %s277, [#allocation12], 128, 128, 8
        $region16: #{tpu_custom_call.1} parent=11 // pred_fallthru
          _
        // Predicated region
        $region17: #{tpu_custom_call.1} parent=11 // pred_check
          %p283 = pneg %p203
        $region18: #{tpu_custom_call.1} parent=11 // pred_check_branch
          %285 = sbr.rel (%p283) target = $region20
        $region19: #{tpu_custom_call.1} parent=11 // pred_region
          _
        $region20: #{tpu_custom_call.1} parent=11 // pred_fallthru
          _
      $region12: #{tpu_custom_call.1} parent=5 // pred_fallthru
        _
      %p286 = scmp.lt.s32.totalorder %s31, 2
      // Predicated region
      $region21: #{tpu_custom_call.1} parent=5 // pred_check
        %p287 = pneg %p286
      $region22: #{tpu_custom_call.1} parent=5 // pred_check_branch
        %289 = sbr.rel (%p287) target = $region24
      $region23: #{tpu_custom_call.1} parent=5 // pred_region
        // Predicated region
        $region25: #{tpu_custom_call.1} parent=23 // pred_check
          %p290 = pneg %p51
        $region26: #{tpu_custom_call.1} parent=23 // pred_check_branch
          %292 = sbr.rel (%p290) target = $region28
        $region27: #{tpu_custom_call.1} parent=23 // pred_region
          %s293 = sand.u32 %s41, 1
          %s294 = scalar_lea.sflag [#allocation3], %s293
          %s295 = sand.u32 %s41, 1
          %s296 = smul.addr %s295, 4
          %s297 = scalar_lea.vmem [#allocation2], %s296
          %s299 = ssub.s32 64, 64
          %300 = vsyncadd %s294, %s299
          %s301 = smul.addr %s31, 64
          %s302 = scalar_lea.hbm %s0, %s301
          %s304 = sshll.u32 %s297, 4
          %s305 = int_to_ptr.vmem [resolvable:$true] %s304
          %307 = dma.hbm_to_vmem [thread:$0]  %s302, 64, %s305, %s294
        $region28: #{tpu_custom_call.1} parent=23 // pred_fallthru
          _
        // Predicated region
        $region29: #{tpu_custom_call.1} parent=23 // pred_check
          %p308 = pneg %p77
        $region30: #{tpu_custom_call.1} parent=23 // pred_check_branch
          %310 = sbr.rel (%p308) target = $region32
        $region31: #{tpu_custom_call.1} parent=23 // pred_region
          %s311 = sand.u32 %s31, 1
          %s312 = scalar_lea.sflag [#allocation6], %s311
          %s313 = sand.u32 %s67, 1
          %s314 = smul.addr %s313, 32
          %s315 = scalar_lea.vmem [#allocation5], %s314
          %s317 = ssub.s32 512, 512
          %318 = vsyncadd %s312, %s317
          %s319 = smul.addr %s31, 4
          %s320 = smul.addr %s319, 128
          %s321 = scalar_lea.hbm %s1, %s320
          %s322 = sshll.u32 %s315, 4
          %s323 = int_to_ptr.vmem [resolvable:$true] %s322
          %328 = dma.hbm_to_vmem [thread:$0]  %s321, 512, %s323, %s312, 128, 128, 8
        $region32: #{tpu_custom_call.1} parent=23 // pred_fallthru
          _
        // Predicated region
        $region33: #{tpu_custom_call.1} parent=23 // pred_check
          %p329 = pneg %p103
        $region34: #{tpu_custom_call.1} parent=23 // pred_check_branch
          %331 = sbr.rel (%p329) target = $region36
        $region35: #{tpu_custom_call.1} parent=23 // pred_region
          %s332 = sand.u32 %s31, 1
          %s333 = scalar_lea.sflag [#allocation6], %s332
          %s334 = sand.u32 %s93, 1
          %s335 = smul.addr %s334, 32
          %s336 = scalar_lea.vmem [#allocation7], %s335
          %s338 = ssub.s32 512, 512
          %339 = vsyncadd %s333, %s338
          %s340 = smul.addr %s31, 4
          %s341 = smul.addr %s340, 128
          %s342 = scalar_lea.hbm %s2, %s341
          %s343 = sshll.u32 %s336, 4
          %s344 = int_to_ptr.vmem [resolvable:$true] %s343
          %349 = dma.hbm_to_vmem [thread:$0]  %s342, 512, %s344, %s333, 128, 128, 8
        $region36: #{tpu_custom_call.1} parent=23 // pred_fallthru
          _
        // Predicated region
        $region37: #{tpu_custom_call.1} parent=23 // pred_check
          %p350 = pneg %p129
        $region38: #{tpu_custom_call.1} parent=23 // pred_check_branch
          %352 = sbr.rel (%p350) target = $region40
        $region39: #{tpu_custom_call.1} parent=23 // pred_region
          %s353 = sand.u32 %s31, 1
          %s354 = scalar_lea.sflag [#allocation9], %s353
          %s355 = sand.u32 %s119, 1
          %s356 = smul.addr %s355, 32
          %s357 = scalar_lea.vmem [#allocation8], %s356
          %s359 = ssub.s32 512, 512
          %360 = vsyncadd %s354, %s359
          %s361 = smul.addr %s31, 4
          %s362 = smul.addr %s361, 128
          %s363 = scalar_lea.hbm %s3, %s362
          %s364 = sshll.u32 %s357, 4
          %s365 = int_to_ptr.vmem [resolvable:$true] %s364
          %370 = dma.hbm_to_vmem [thread:$0]  %s363, 512, %s365, %s354, 128, 128, 8
        $region40: #{tpu_custom_call.1} parent=23 // pred_fallthru
          _
        // Predicated region
        $region41: #{tpu_custom_call.1} parent=23 // pred_check
          %p371 = pneg %p155
        $region42: #{tpu_custom_call.1} parent=23 // pred_check_branch
          %373 = sbr.rel (%p371) target = $region44
        $region43: #{tpu_custom_call.1} parent=23 // pred_region
          %s374 = sand.u32 %s31, 1
          %s375 = scalar_lea.sflag [#allocation9], %s374
          %s376 = sand.u32 %s145, 1
          %s377 = smul.addr %s376, 32
          %s378 = scalar_lea.vmem [#allocation10], %s377
          %s380 = ssub.s32 512, 512
          %381 = vsyncadd %s375, %s380
          %s382 = smul.addr %s31, 4
          %s383 = smul.addr %s382, 128
          %s384 = scalar_lea.hbm %s4, %s383
          %s385 = sshll.u32 %s378, 4
          %s386 = int_to_ptr.vmem [resolvable:$true] %s385
          %391 = dma.hbm_to_vmem [thread:$0]  %s384, 512, %s386, %s375, 128, 128, 8
        $region44: #{tpu_custom_call.1} parent=23 // pred_fallthru
          _
      $region24: #{tpu_custom_call.1} parent=5 // pred_fallthru
        _
      %p392 = scmp.le.s32.totalorder 1, %s31
      %p393 = scmp.lt.s32.totalorder %s31, 3
      %p394 = pnand %p392, %p393
      %p395 = pneg %p394
      // Predicated region
      $region45: #{tpu_custom_call.1} parent=5 // pred_check
        _
      $region46: #{tpu_custom_call.1} parent=5 // pred_check_branch
        %397 = sbr.rel (%p394) target = $region48
      $region47: #{tpu_custom_call.1} parent=5 // pred_region
        %s398 = ssub.s32 %s31, 1
        %s399 = sand.u32 %s44, 1
        %s400 = scalar_lea.sflag [#allocation3], %s399
        %s401 = sand.u32 %s44, 1
        %s402 = smul.addr %s401, 4
        %s403 = scalar_lea.vmem [#allocation2], %s402
        // Predicated region
        $region49: #{tpu_custom_call.1} parent=47 // pred_check
          %p404 = pneg %p57
        $region50: #{tpu_custom_call.1} parent=47 // pred_check_branch
          %406 = sbr.rel (%p404) target = $region52
        $region51: #{tpu_custom_call.1} parent=47 // pred_region
          %407 = dma.done %s400, 64
        $region52: #{tpu_custom_call.1} parent=47 // pred_fallthru
          _
        %s408 = sand.u32 %s36, 1
        %s409 = scalar_lea.sflag [#allocation6], %s408
        %s410 = sand.u32 %s70, 1
        %s411 = smul.addr %s410, 32
        %s412 = scalar_lea.vmem [#allocation5], %s411
        // Predicated region
        $region53: #{tpu_custom_call.1} parent=47 // pred_check
          %p413 = pneg %p83
        $region54: #{tpu_custom_call.1} parent=47 // pred_check_branch
          %415 = sbr.rel (%p413) target = $region56
        $region55: #{tpu_custom_call.1} parent=47 // pred_region
          %416 = dma.done %s409, 512
        $region56: #{tpu_custom_call.1} parent=47 // pred_fallthru
          _
        %s417 = sand.u32 %s36, 1
        %s418 = scalar_lea.sflag [#allocation6], %s417
        %s419 = sand.u32 %s96, 1
        %s420 = smul.addr %s419, 32
        %s421 = scalar_lea.vmem [#allocation7], %s420
        // Predicated region
        $region57: #{tpu_custom_call.1} parent=47 // pred_check
          %p422 = pneg %p109
        $region58: #{tpu_custom_call.1} parent=47 // pred_check_branch
          %424 = sbr.rel (%p422) target = $region60
        $region59: #{tpu_custom_call.1} parent=47 // pred_region
          %425 = dma.done %s418, 512
        $region60: #{tpu_custom_call.1} parent=47 // pred_fallthru
          _
        %s426 = sand.u32 %s36, 1
        %s427 = scalar_lea.sflag [#allocation9], %s426
        %s428 = sand.u32 %s122, 1
        %s429 = smul.addr %s428, 32
        %s430 = scalar_lea.vmem [#allocation8], %s429
        // Predicated region
        $region61: #{tpu_custom_call.1} parent=47 // pred_check
          %p431 = pneg %p135
        $region62: #{tpu_custom_call.1} parent=47 // pred_check_branch
          %433 = sbr.rel (%p431) target = $region64
        $region63: #{tpu_custom_call.1} parent=47 // pred_region
          %434 = dma.done %s427, 512
        $region64: #{tpu_custom_call.1} parent=47 // pred_fallthru
          _
        %s435 = sand.u32 %s36, 1
        %s436 = scalar_lea.sflag [#allocation9], %s435
        %s437 = sand.u32 %s148, 1
        %s438 = smul.addr %s437, 32
        %s439 = scalar_lea.vmem [#allocation10], %s438
        // Predicated region
        $region65: #{tpu_custom_call.1} parent=47 // pred_check
          %p440 = pneg %p161
        $region66: #{tpu_custom_call.1} parent=47 // pred_check_branch
          %442 = sbr.rel (%p440) target = $region68
        $region67: #{tpu_custom_call.1} parent=47 // pred_region
          %443 = dma.done %s436, 512
        $region68: #{tpu_custom_call.1} parent=47 // pred_fallthru
          _
        // Predicated region
        $region69: #{tpu_custom_call.1} parent=47 // pred_check
          %p444 = pneg %p182
        $region70: #{tpu_custom_call.1} parent=47 // pred_check_branch
          %446 = sbr.rel (%p444) target = $region72
        $region71: #{tpu_custom_call.1} parent=47 // pred_region
          %447 = dma.done [#allocation12], 512
        $region72: #{tpu_custom_call.1} parent=47 // pred_fallthru
          _
        %s448 = sand.u32 %s44, 1
        %s449 = scalar_lea.sflag [#allocation3], %s448
        %s450 = sand.u32 %s44, 1
        %s451 = smul.addr %s450, 4
        %s452 = scalar_lea.vmem [#allocation2], %s451
        %p453 = pneg %p57
        %p454 = pneg %p54
        %s455 = sand.u32 %s36, 1
        %s456 = scalar_lea.sflag [#allocation6], %s455
        %s457 = sand.u32 %s70, 1
        %s458 = smul.addr %s457, 32
        %s459 = scalar_lea.vmem [#allocation5], %s458
        %p460 = pneg %p83
        %p461 = pneg %p80
        %s462 = sand.u32 %s36, 1
        %s463 = scalar_lea.sflag [#allocation6], %s462
        %s464 = sand.u32 %s96, 1
        %s465 = smul.addr %s464, 32
        %s466 = scalar_lea.vmem [#allocation7], %s465
        %p467 = pneg %p109
        %p468 = pneg %p106
        %s469 = sand.u32 %s36, 1
        %s470 = scalar_lea.sflag [#allocation9], %s469
        %s471 = sand.u32 %s122, 1
        %s472 = smul.addr %s471, 32
        %s473 = scalar_lea.vmem [#allocation8], %s472
        %p474 = pneg %p135
        %p475 = pneg %p132
        %s476 = sand.u32 %s36, 1
        %s477 = scalar_lea.sflag [#allocation9], %s476
        %s478 = sand.u32 %s148, 1
        %s479 = smul.addr %s478, 32
        %s480 = scalar_lea.vmem [#allocation10], %s479
        %p481 = pneg %p161
        %p482 = pneg %p158
        %p483 = pneg %p182
        %p484 = pneg %p179
        %p485 = pneg %p203
        %p486 = pneg %p200
        %p487 = pneg %p229
        %p488 = pneg %p226
        %s489 = sand.u32 %s216, 1
        %s490 = scalar_lea.sflag [#allocation4], %s489
        %s491 = sand.u32 %s216, 1
        %s492 = smul.addr %s491, 8
        %s493 = scalar_lea.vmem [#allocation13], %s492
        %p494 = pneg %p255
        %p495 = pneg %p252
        %s496 = sand.u32 %s242, 1
        %s497 = scalar_lea.sflag [#allocation15], %s496
        %s498 = sand.u32 %s242, 1
        %s499 = smul.addr %s498, 32
        %s500 = scalar_lea.vmem [#allocation14], %s499
        %v501 = vld [vmem:[%s412] sm:$0xff]
        %v502 = vld [vmem:[%s412 + $0x8] sm:$0xff]
        %v503 = vld [vmem:[%s412 + $0x10] sm:$0xff]
        %v504 = vld [vmem:[%s412 + $0x18] sm:$0xff]
        %v505 = vld [vmem:[%s421] sm:$0xff]
        %v506 = vld [vmem:[%s421 + $0x8] sm:$0xff]
        %v507 = vld [vmem:[%s421 + $0x10] sm:$0xff]
        %v508 = vld [vmem:[%s421 + $0x18] sm:$0xff]
        %v509 = vld [vmem:[%s430] sm:$0xff]
        %v510 = vld [vmem:[%s430 + $0x8] sm:$0xff]
        %v511 = vld [vmem:[%s430 + $0x10] sm:$0xff]
        %v512 = vld [vmem:[%s430 + $0x18] sm:$0xff]
        %v513 = vld [vmem:[%s439] sm:$0xff]
        %v514 = vld [vmem:[%s439 + $0x8] sm:$0xff]
        %v515 = vld [vmem:[%s439 + $0x10] sm:$0xff]
        %v516 = vld [vmem:[%s439 + $0x18] sm:$0xff]
        %v517 = vld [vmem:[%s403] sm:$0xf]
        %v518 = vmul.f32 %v501, 0.35355338
        %v519 = vmul.f32 %v502, 0.35355338
        %v520 = vmul.f32 %v503, 0.35355338
        %v521 = vmul.f32 %v504, 0.35355338
        %vm522 = vcmask 64512
        %v524 = vsel %vm522, %v518, 0
        %v527 = vsel %vm522, %v505, 0
        %529 = vmatprep.subr.mxu0 0.0
        %530 = vmatpush1.xpose.msra.mxu0 %v527
        %531 = vmatprep.subr.mxu0 0.0
        %532 = vmatpush1.xpose.msra.mxu0 0.0
        %533 = vmatprep.subr.mxu0 0.0
        %534 = vmatpush1.xpose.msra.mxu0 0.0
        %535 = vmatprep.subr.mxu0 0.0
        %536 = vmatpush1.xpose.msra.mxu0 0.0
        %537 = vmatprep.subr.mxu0 0.0
        %538 = vmatpush1.xpose.msra.mxu0 0.0
        %539 = vmatprep.subr.mxu0 0.0
        %540 = vmatpush1.xpose.msra.mxu0 0.0
        %541 = vmatprep.subr.mxu0 0.0
        %542 = vmatpush1.xpose.msra.mxu0 0.0
        %543 = vmatprep.subr.mxu0 0.0
        %544 = vmatpush1.xpose.msra.mxu0 0.0
        %545 = vmatprep.subr.mxu0 0.0
        %546 = vmatpush1.xpose.msra.mxu0 0.0
        %547 = vmatprep.subr.mxu0 0.0
        %548 = vmatpush1.xpose.msra.mxu0 0.0
        %549 = vmatprep.subr.mxu0 0.0
        %550 = vmatpush1.xpose.msra.mxu0 0.0
        %551 = vmatprep.subr.mxu0 0.0
        %552 = vmatpush1.xpose.msra.mxu0 0.0
        %553 = vmatprep.subr.mxu0 0.0
        %554 = vmatpush1.xpose.msra.mxu0 0.0
        %555 = vmatprep.subr.mxu0 0.0
        %556 = vmatpush1.xpose.msra.mxu0 0.0
        %557 = vmatprep.subr.mxu0 0.0
        %558 = vmatpush1.xpose.msra.mxu0 0.0
        %559 = vmatprep.subr.mxu0 0.0
        %560 = vmatpush1.xpose.msra.mxu0 0.0
        %561 = vmatprep.subr.mxu0 0.0
        %562 = vmatpush1.xpose.msra.mxu0 0.0
        %563 = vmatprep.subr.mxu0 0.0
        %564 = vmatpush1.xpose.msra.mxu0 0.0
        %565 = vmatprep.subr.mxu0 0.0
        %566 = vmatpush1.xpose.msra.mxu0 0.0
        %567 = vmatprep.subr.mxu0 0.0
        %568 = vmatpush1.xpose.msra.mxu0 0.0
        %569 = vmatprep.subr.mxu0 0.0
        %570 = vmatpush1.xpose.msra.mxu0 0.0
        %571 = vmatprep.subr.mxu0 0.0
        %572 = vmatpush1.xpose.msra.mxu0 0.0
        %573 = vmatprep.subr.mxu0 0.0
        %574 = vmatpush1.xpose.msra.mxu0 0.0
        %575 = vmatprep.subr.mxu0 0.0
        %576 = vmatpush1.xpose.msra.mxu0 0.0
        %577 = vmatprep.subr.mxu0 0.0
        %578 = vmatpush1.xpose.msra.mxu0 0.0
        %579 = vmatprep.subr.mxu0 0.0
        %580 = vmatpush1.xpose.msra.mxu0 0.0
        %581 = vmatprep.subr.mxu0 0.0
        %582 = vmatpush1.xpose.msra.mxu0 0.0
        %583 = vmatprep.subr.mxu0 0.0
        %584 = vmatpush1.xpose.msra.mxu0 0.0
        %585 = vmatprep.subr.mxu0 0.0
        %586 = vmatpush1.xpose.msra.mxu0 0.0
        %587 = vmatprep.subr.mxu0 0.0
        %588 = vmatpush1.xpose.msra.mxu0 0.0
        %589 = vmatprep.subr.mxu0 0.0
        %590 = vmatpush1.xpose.msra.mxu0 0.0
        %591 = vmatprep.subr.mxu0 0.0
        %592 = vmatpush1.xpose.msra.mxu0 0.0
        %593 = vmatprep.mubr.f32.mxu0 0.0
        %594 = vmatmul.mubr.f32.gmra.mrb[0].mxu0 %v524
        %v595 = vpop.f32.mrb[0].mxu0
        %v596 = vadd.f32 %v513, %v595
        %v597 = vpop.f32.mrb[0].mxu0
        %598 = vdwg.mxu0
        %v600 = vsel %vm522, %v519, 0
        %v603 = vsel %vm522, %v506, 0
        %605 = vmatprep.subr.mxu0 0.0
        %606 = vmatpush1.xpose.msra.mxu0 %v603
        %607 = vmatprep.subr.mxu0 0.0
        %608 = vmatpush1.xpose.msra.mxu0 0.0
        %609 = vmatprep.subr.mxu0 0.0
        %610 = vmatpush1.xpose.msra.mxu0 0.0
        %611 = vmatprep.subr.mxu0 0.0
        %612 = vmatpush1.xpose.msra.mxu0 0.0
        %613 = vmatprep.subr.mxu0 0.0
        %614 = vmatpush1.xpose.msra.mxu0 0.0
        %615 = vmatprep.subr.mxu0 0.0
        %616 = vmatpush1.xpose.msra.mxu0 0.0
        %617 = vmatprep.subr.mxu0 0.0
        %618 = vmatpush1.xpose.msra.mxu0 0.0
        %619 = vmatprep.subr.mxu0 0.0
        %620 = vmatpush1.xpose.msra.mxu0 0.0
        %621 = vmatprep.subr.mxu0 0.0
        %622 = vmatpush1.xpose.msra.mxu0 0.0
        %623 = vmatprep.subr.mxu0 0.0
        %624 = vmatpush1.xpose.msra.mxu0 0.0
        %625 = vmatprep.subr.mxu0 0.0
        %626 = vmatpush1.xpose.msra.mxu0 0.0
        %627 = vmatprep.subr.mxu0 0.0
        %628 = vmatpush1.xpose.msra.mxu0 0.0
        %629 = vmatprep.subr.mxu0 0.0
        %630 = vmatpush1.xpose.msra.mxu0 0.0
        %631 = vmatprep.subr.mxu0 0.0
        %632 = vmatpush1.xpose.msra.mxu0 0.0
        %633 = vmatprep.subr.mxu0 0.0
        %634 = vmatpush1.xpose.msra.mxu0 0.0
        %635 = vmatprep.subr.mxu0 0.0
        %636 = vmatpush1.xpose.msra.mxu0 0.0
        %637 = vmatprep.subr.mxu0 0.0
        %638 = vmatpush1.xpose.msra.mxu0 0.0
        %639 = vmatprep.subr.mxu0 0.0
        %640 = vmatpush1.xpose.msra.mxu0 0.0
        %641 = vmatprep.subr.mxu0 0.0
        %642 = vmatpush1.xpose.msra.mxu0 0.0
        %643 = vmatprep.subr.mxu0 0.0
        %644 = vmatpush1.xpose.msra.mxu0 0.0
        %645 = vmatprep.subr.mxu0 0.0
        %646 = vmatpush1.xpose.msra.mxu0 0.0
        %647 = vmatprep.subr.mxu0 0.0
        %648 = vmatpush1.xpose.msra.mxu0 0.0
        %649 = vmatprep.subr.mxu0 0.0
        %650 = vmatpush1.xpose.msra.mxu0 0.0
        %651 = vmatprep.subr.mxu0 0.0
        %652 = vmatpush1.xpose.msra.mxu0 0.0
        %653 = vmatprep.subr.mxu0 0.0
        %654 = vmatpush1.xpose.msra.mxu0 0.0
        %655 = vmatprep.subr.mxu0 0.0
        %656 = vmatpush1.xpose.msra.mxu0 0.0
        %657 = vmatprep.subr.mxu0 0.0
        %658 = vmatpush1.xpose.msra.mxu0 0.0
        %659 = vmatprep.subr.mxu0 0.0
        %660 = vmatpush1.xpose.msra.mxu0 0.0
        %661 = vmatprep.subr.mxu0 0.0
        %662 = vmatpush1.xpose.msra.mxu0 0.0
        %663 = vmatprep.subr.mxu0 0.0
        %664 = vmatpush1.xpose.msra.mxu0 0.0
        %665 = vmatprep.subr.mxu0 0.0
        %666 = vmatpush1.xpose.msra.mxu0 0.0
        %667 = vmatprep.subr.mxu0 0.0
        %668 = vmatpush1.xpose.msra.mxu0 0.0
        %669 = vmatprep.mubr.f32.mxu0 0.0
        %670 = vmatmul.mubr.f32.gmra.mrb[0].mxu0 %v600
        %v671 = vpop.f32.mrb[0].mxu0
        %v672 = vadd.f32 %v514, %v671
        %v673 = vpop.f32.mrb[0].mxu0
        %674 = vdwg.mxu0
        %v676 = vsel %vm522, %v520, 0
        %v679 = vsel %vm522, %v507, 0
        %681 = vmatprep.subr.mxu0 0.0
        %682 = vmatpush1.xpose.msra.mxu0 %v679
        %683 = vmatprep.subr.mxu0 0.0
        %684 = vmatpush1.xpose.msra.mxu0 0.0
        %685 = vmatprep.subr.mxu0 0.0
        %686 = vmatpush1.xpose.msra.mxu0 0.0
        %687 = vmatprep.subr.mxu0 0.0
        %688 = vmatpush1.xpose.msra.mxu0 0.0
        %689 = vmatprep.subr.mxu0 0.0
        %690 = vmatpush1.xpose.msra.mxu0 0.0
        %691 = vmatprep.subr.mxu0 0.0
        %692 = vmatpush1.xpose.msra.mxu0 0.0
        %693 = vmatprep.subr.mxu0 0.0
        %694 = vmatpush1.xpose.msra.mxu0 0.0
        %695 = vmatprep.subr.mxu0 0.0
        %696 = vmatpush1.xpose.msra.mxu0 0.0
        %697 = vmatprep.subr.mxu0 0.0
        %698 = vmatpush1.xpose.msra.mxu0 0.0
        %699 = vmatprep.subr.mxu0 0.0
        %700 = vmatpush1.xpose.msra.mxu0 0.0
        %701 = vmatprep.subr.mxu0 0.0
        %702 = vmatpush1.xpose.msra.mxu0 0.0
        %703 = vmatprep.subr.mxu0 0.0
        %704 = vmatpush1.xpose.msra.mxu0 0.0
        %705 = vmatprep.subr.mxu0 0.0
        %706 = vmatpush1.xpose.msra.mxu0 0.0
        %707 = vmatprep.subr.mxu0 0.0
        %708 = vmatpush1.xpose.msra.mxu0 0.0
        %709 = vmatprep.subr.mxu0 0.0
        %710 = vmatpush1.xpose.msra.mxu0 0.0
        %711 = vmatprep.subr.mxu0 0.0
        %712 = vmatpush1.xpose.msra.mxu0 0.0
        %713 = vmatprep.subr.mxu0 0.0
        %714 = vmatpush1.xpose.msra.mxu0 0.0
        %715 = vmatprep.subr.mxu0 0.0
        %716 = vmatpush1.xpose.msra.mxu0 0.0
        %717 = vmatprep.subr.mxu0 0.0
        %718 = vmatpush1.xpose.msra.mxu0 0.0
        %719 = vmatprep.subr.mxu0 0.0
        %720 = vmatpush1.xpose.msra.mxu0 0.0
        %721 = vmatprep.subr.mxu0 0.0
        %722 = vmatpush1.xpose.msra.mxu0 0.0
        %723 = vmatprep.subr.mxu0 0.0
        %724 = vmatpush1.xpose.msra.mxu0 0.0
        %725 = vmatprep.subr.mxu0 0.0
        %726 = vmatpush1.xpose.msra.mxu0 0.0
        %727 = vmatprep.subr.mxu0 0.0
        %728 = vmatpush1.xpose.msra.mxu0 0.0
        %729 = vmatprep.subr.mxu0 0.0
        %730 = vmatpush1.xpose.msra.mxu0 0.0
        %731 = vmatprep.subr.mxu0 0.0
        %732 = vmatpush1.xpose.msra.mxu0 0.0
        %733 = vmatprep.subr.mxu0 0.0
        %734 = vmatpush1.xpose.msra.mxu0 0.0
        %735 = vmatprep.subr.mxu0 0.0
        %736 = vmatpush1.xpose.msra.mxu0 0.0
        %737 = vmatprep.subr.mxu0 0.0
        %738 = vmatpush1.xpose.msra.mxu0 0.0
        %739 = vmatprep.subr.mxu0 0.0
        %740 = vmatpush1.xpose.msra.mxu0 0.0
        %741 = vmatprep.subr.mxu0 0.0
        %742 = vmatpush1.xpose.msra.mxu0 0.0
        %743 = vmatprep.subr.mxu0 0.0
        %744 = vmatpush1.xpose.msra.mxu0 0.0
        %745 = vmatprep.mubr.f32.mxu0 0.0
        %746 = vmatmul.mubr.f32.gmra.mrb[0].mxu0 %v676
        %v747 = vpop.f32.mrb[0].mxu0
        %v748 = vadd.f32 %v515, %v747
        %v749 = vpop.f32.mrb[0].mxu0
        %750 = vdwg.mxu0
        %v752 = vsel %vm522, %v521, 0
        %v755 = vsel %vm522, %v508, 0
        %757 = vmatprep.subr.mxu0 0.0
        %758 = vmatpush1.xpose.msra.mxu0 %v755
        %759 = vmatprep.subr.mxu0 0.0
        %760 = vmatpush1.xpose.msra.mxu0 0.0
        %761 = vmatprep.subr.mxu0 0.0
        %762 = vmatpush1.xpose.msra.mxu0 0.0
        %763 = vmatprep.subr.mxu0 0.0
        %764 = vmatpush1.xpose.msra.mxu0 0.0
        %765 = vmatprep.subr.mxu0 0.0
        %766 = vmatpush1.xpose.msra.mxu0 0.0
        %767 = vmatprep.subr.mxu0 0.0
        %768 = vmatpush1.xpose.msra.mxu0 0.0
        %769 = vmatprep.subr.mxu0 0.0
        %770 = vmatpush1.xpose.msra.mxu0 0.0
        %771 = vmatprep.subr.mxu0 0.0
        %772 = vmatpush1.xpose.msra.mxu0 0.0
        %773 = vmatprep.subr.mxu0 0.0
        %774 = vmatpush1.xpose.msra.mxu0 0.0
        %775 = vmatprep.subr.mxu0 0.0
        %776 = vmatpush1.xpose.msra.mxu0 0.0
        %777 = vmatprep.subr.mxu0 0.0
        %778 = vmatpush1.xpose.msra.mxu0 0.0
        %779 = vmatprep.subr.mxu0 0.0
        %780 = vmatpush1.xpose.msra.mxu0 0.0
        %781 = vmatprep.subr.mxu0 0.0
        %782 = vmatpush1.xpose.msra.mxu0 0.0
        %783 = vmatprep.subr.mxu0 0.0
        %784 = vmatpush1.xpose.msra.mxu0 0.0
        %785 = vmatprep.subr.mxu0 0.0
        %786 = vmatpush1.xpose.msra.mxu0 0.0
        %787 = vmatprep.subr.mxu0 0.0
        %788 = vmatpush1.xpose.msra.mxu0 0.0
        %789 = vmatprep.subr.mxu0 0.0
        %790 = vmatpush1.xpose.msra.mxu0 0.0
        %791 = vmatprep.subr.mxu0 0.0
        %792 = vmatpush1.xpose.msra.mxu0 0.0
        %793 = vmatprep.subr.mxu0 0.0
        %794 = vmatpush1.xpose.msra.mxu0 0.0
        %795 = vmatprep.subr.mxu0 0.0
        %796 = vmatpush1.xpose.msra.mxu0 0.0
        %797 = vmatprep.subr.mxu0 0.0
        %798 = vmatpush1.xpose.msra.mxu0 0.0
        %799 = vmatprep.subr.mxu0 0.0
        %800 = vmatpush1.xpose.msra.mxu0 0.0
        %801 = vmatprep.subr.mxu0 0.0
        %802 = vmatpush1.xpose.msra.mxu0 0.0
        %803 = vmatprep.subr.mxu0 0.0
        %804 = vmatpush1.xpose.msra.mxu0 0.0
        %805 = vmatprep.subr.mxu0 0.0
        %806 = vmatpush1.xpose.msra.mxu0 0.0
        %807 = vmatprep.subr.mxu0 0.0
        %808 = vmatpush1.xpose.msra.mxu0 0.0
        %809 = vmatprep.subr.mxu0 0.0
        %810 = vmatpush1.xpose.msra.mxu0 0.0
        %811 = vmatprep.subr.mxu0 0.0
        %812 = vmatpush1.xpose.msra.mxu0 0.0
        %813 = vmatprep.subr.mxu0 0.0
        %814 = vmatpush1.xpose.msra.mxu0 0.0
        %815 = vmatprep.subr.mxu0 0.0
        %816 = vmatpush1.xpose.msra.mxu0 0.0
        %817 = vmatprep.subr.mxu0 0.0
        %818 = vmatpush1.xpose.msra.mxu0 0.0
        %819 = vmatprep.subr.mxu0 0.0
        %820 = vmatpush1.xpose.msra.mxu0 0.0
        %821 = vmatprep.mubr.f32.mxu0 0.0
        %822 = vmatmul.mubr.f32.gmra.mrb[0].mxu0 %v752
        %v823 = vpop.f32.mrb[0].mxu0
        %v824 = vadd.f32 %v516, %v823
        %v825 = vpop.f32.mrb[0].mxu0
        %826 = vdwg.mxu0
        %v827 = vsel %vm522, %v596, -inf
        %828 = vmax.xlane.f32.xlu0 %v827
        %v829 = vpop.xlane.xlu0 %828
        %v830 = vsel %vm522, %v672, -inf
        %831 = vmax.xlane.f32.xlu0 %v830
        %v832 = vpop.xlane.xlu0 %831
        %v833 = vsel %vm522, %v748, -inf
        %834 = vmax.xlane.f32.xlu0 %v833
        %v835 = vpop.xlane.xlu0 %834
        %v836 = vsel %vm522, %v824, -inf
        %837 = vmax.xlane.f32.xlu0 %v836
        %v838 = vpop.xlane.xlu0 %837
        %v839 = vsub.f32 %v596, %v829
        %v840 = vsub.f32 %v672, %v832
        %v841 = vsub.f32 %v748, %v835
        %v842 = vsub.f32 %v824, %v838
        %v843 = vmul.f32 %v839, 1.442695
        %v844 = vpow.pop %v843
        %v845 = vmul.f32 %v840, 1.442695
        %v846 = vpow.pop %v845
        %v847 = vmul.f32 %v841, 1.442695
        %v848 = vpow.pop %v847
        %v849 = vmul.f32 %v842, 1.442695
        %v850 = vpow.pop %v849
        %v851 = vsel %vm522, %v844, 0.0
        %852 = vadd.xlane.f32.xlu0 %v851
        %v853 = vpop.xlane.xlu0 %852
        %v854 = vsel %vm522, %v846, 0.0
        %855 = vadd.xlane.f32.xlu0 %v854
        %v856 = vpop.xlane.xlu0 %855
        %v857 = vsel %vm522, %v848, 0.0
        %858 = vadd.xlane.f32.xlu0 %v857
        %v859 = vpop.xlane.xlu0 %858
        %v860 = vsel %vm522, %v850, 0.0
        %861 = vadd.xlane.f32.xlu0 %v860
        %v862 = vpop.xlane.xlu0 %861
        %v863 = vrcp.pop %v853
        %v864 = vrcp.pop %v856
        %v865 = vrcp.pop %v859
        %v866 = vrcp.pop %v862
        %v867 = vmul.f32 %v844, %v863
        %v868 = vmul.f32 %v846, %v864
        %v869 = vmul.f32 %v848, %v865
        %v870 = vmul.f32 %v850, %v866
        %v873 = vunpack.c.l.s4 1966171168
        %v874 = vunpack.c.0.s8 %v873
        %v875 = vlaneseq
        %v876 = vshrl.u32 %v875, 7
        %v877 = vsub.s32 %v874, %v876
        %v878 = vrot.slane %v517, %v877
        %v879 = vcombine.high %v878, %v878
        %v881 = vunpack.c.l.s4 1966171168
        %v882 = vunpack.c.0.s8 %v881
        %v883 = vlaneseq
        %v884 = vshrl.u32 %v883, 7
        %v885 = vsub.s32 %v882, %v884
        %v886 = vrot.slane %v878, %v885
        %v888 = vunpack.c.l.s4 1966171168
        %v889 = vunpack.c.0.s8 %v888
        %v890 = vlaneseq
        %v891 = vshrl.u32 %v890, 7
        %v892 = vsub.s32 %v889, %v891
        %v893 = vrot.slane %v879, %v892
        %v894 = vcombine.high %v886, %v886
        %v895 = vcombine.high %v893, %v893
        %v896 = vlaneseq
        %v897 = vshrl.u32 %v896, 7
        %v898 = vsub.s32 0, %v897
        %v899 = vrot.slane %v886, %v898
        %v900 = vlaneseq
        %v901 = vshrl.u32 %v900, 7
        %v902 = vsub.s32 0, %v901
        %v903 = vrot.slane %v893, %v902
        %v904 = vlaneseq
        %v905 = vshrl.u32 %v904, 7
        %v906 = vsub.s32 0, %v905
        %v907 = vrot.slane %v894, %v906
        %v908 = vlaneseq
        %v909 = vshrl.u32 %v908, 7
        %v910 = vsub.s32 0, %v909
        %v911 = vrot.slane %v895, %v910
        %v916 = vmul.f32 %v867, %v899
        %v917 = vmul.f32 %v868, %v903
        %v918 = vmul.f32 %v869, %v907
        %v919 = vmul.f32 %v870, %v911
        %920 = vst.msk [vmem:[%s500] sm:$0xff] %vm522, %v916
        %921 = vst.msk [vmem:[%s500 + $0x8] sm:$0xff] %vm522, %v917
        %922 = vst.msk [vmem:[%s500 + $0x10] sm:$0xff] %vm522, %v918
        %923 = vst.msk [vmem:[%s500 + $0x18] sm:$0xff] %vm522, %v919
        %v925 = vsel %vm522, %v916, 0
        %927 = vmatprep.subr.mxu0 0.0
        %928 = vmatpush1.msra.mxu0 %v509
        %929 = vmatprep.subr.mxu0 0.0
        %930 = vmatpush1.msra.mxu0 0.0
        %931 = vmatprep.subr.mxu0 0.0
        %932 = vmatpush1.msra.mxu0 0.0
        %933 = vmatprep.subr.mxu0 0.0
        %934 = vmatpush1.msra.mxu0 0.0
        %935 = vmatprep.subr.mxu0 0.0
        %936 = vmatpush1.msra.mxu0 0.0
        %937 = vmatprep.subr.mxu0 0.0
        %938 = vmatpush1.msra.mxu0 0.0
        %939 = vmatprep.subr.mxu0 0.0
        %940 = vmatpush1.msra.mxu0 0.0
        %941 = vmatprep.subr.mxu0 0.0
        %942 = vmatpush1.msra.mxu0 0.0
        %943 = vmatprep.subr.mxu0 0.0
        %944 = vmatpush1.msra.mxu0 0.0
        %945 = vmatprep.subr.mxu0 0.0
        %946 = vmatpush1.msra.mxu0 0.0
        %947 = vmatprep.subr.mxu0 0.0
        %948 = vmatpush1.msra.mxu0 0.0
        %949 = vmatprep.subr.mxu0 0.0
        %950 = vmatpush1.msra.mxu0 0.0
        %951 = vmatprep.subr.mxu0 0.0
        %952 = vmatpush1.msra.mxu0 0.0
        %953 = vmatprep.subr.mxu0 0.0
        %954 = vmatpush1.msra.mxu0 0.0
        %955 = vmatprep.subr.mxu0 0.0
        %956 = vmatpush1.msra.mxu0 0.0
        %957 = vmatprep.subr.mxu0 0.0
        %958 = vmatpush1.msra.mxu0 0.0
        %959 = vmatprep.subr.mxu0 0.0
        %960 = vmatpush1.msra.mxu0 0.0
        %961 = vmatprep.subr.mxu0 0.0
        %962 = vmatpush1.msra.mxu0 0.0
        %963 = vmatprep.subr.mxu0 0.0
        %964 = vmatpush1.msra.mxu0 0.0
        %965 = vmatprep.subr.mxu0 0.0
        %966 = vmatpush1.msra.mxu0 0.0
        %967 = vmatprep.subr.mxu0 0.0
        %968 = vmatpush1.msra.mxu0 0.0
        %969 = vmatprep.subr.mxu0 0.0
        %970 = vmatpush1.msra.mxu0 0.0
        %971 = vmatprep.subr.mxu0 0.0
        %972 = vmatpush1.msra.mxu0 0.0
        %973 = vmatprep.subr.mxu0 0.0
        %974 = vmatpush1.msra.mxu0 0.0
        %975 = vmatprep.subr.mxu0 0.0
        %976 = vmatpush1.msra.mxu0 0.0
        %977 = vmatprep.subr.mxu0 0.0
        %978 = vmatpush1.msra.mxu0 0.0
        %979 = vmatprep.subr.mxu0 0.0
        %980 = vmatpush1.msra.mxu0 0.0
        %981 = vmatprep.subr.mxu0 0.0
        %982 = vmatpush1.msra.mxu0 0.0
        %983 = vmatprep.subr.mxu0 0.0
        %984 = vmatpush1.msra.mxu0 0.0
        %985 = vmatprep.subr.mxu0 0.0
        %986 = vmatpush1.msra.mxu0 0.0
        %987 = vmatprep.subr.mxu0 0.0
        %988 = vmatpush1.msra.mxu0 0.0
        %989 = vmatprep.subr.mxu0 0.0
        %990 = vmatpush1.msra.mxu0 0.0
        %991 = vmatprep.mubr.f32.mxu0 0.0
        %992 = vmatmul.mubr.f32.gmra.mrb[0].mxu0 %v925
        %v993 = vpop.f32.mrb[0].mxu0
        %v994 = vadd.f32 0.0, %v993
        %v995 = vpop.f32.mrb[0].mxu0
        %996 = vdwg.mxu0
        %v998 = vsel %vm522, %v917, 0
        %1000 = vmatprep.subr.mxu0 0.0
        %1001 = vmatpush1.msra.mxu0 %v510
        %1002 = vmatprep.subr.mxu0 0.0
        %1003 = vmatpush1.msra.mxu0 0.0
        %1004 = vmatprep.subr.mxu0 0.0
        %1005 = vmatpush1.msra.mxu0 0.0
        %1006 = vmatprep.subr.mxu0 0.0
        %1007 = vmatpush1.msra.mxu0 0.0
        %1008 = vmatprep.subr.mxu0 0.0
        %1009 = vmatpush1.msra.mxu0 0.0
        %1010 = vmatprep.subr.mxu0 0.0
        %1011 = vmatpush1.msra.mxu0 0.0
        %1012 = vmatprep.subr.mxu0 0.0
        %1013 = vmatpush1.msra.mxu0 0.0
        %1014 = vmatprep.subr.mxu0 0.0
        %1015 = vmatpush1.msra.mxu0 0.0
        %1016 = vmatprep.subr.mxu0 0.0
        %1017 = vmatpush1.msra.mxu0 0.0
        %1018 = vmatprep.subr.mxu0 0.0
        %1019 = vmatpush1.msra.mxu0 0.0
        %1020 = vmatprep.subr.mxu0 0.0
        %1021 = vmatpush1.msra.mxu0 0.0
        %1022 = vmatprep.subr.mxu0 0.0
        %1023 = vmatpush1.msra.mxu0 0.0
        %1024 = vmatprep.subr.mxu0 0.0
        %1025 = vmatpush1.msra.mxu0 0.0
        %1026 = vmatprep.subr.mxu0 0.0
        %1027 = vmatpush1.msra.mxu0 0.0
        %1028 = vmatprep.subr.mxu0 0.0
        %1029 = vmatpush1.msra.mxu0 0.0
        %1030 = vmatprep.subr.mxu0 0.0
        %1031 = vmatpush1.msra.mxu0 0.0
        %1032 = vmatprep.subr.mxu0 0.0
        %1033 = vmatpush1.msra.mxu0 0.0
        %1034 = vmatprep.subr.mxu0 0.0
        %1035 = vmatpush1.msra.mxu0 0.0
        %1036 = vmatprep.subr.mxu0 0.0
        %1037 = vmatpush1.msra.mxu0 0.0
        %1038 = vmatprep.subr.mxu0 0.0
        %1039 = vmatpush1.msra.mxu0 0.0
        %1040 = vmatprep.subr.mxu0 0.0
        %1041 = vmatpush1.msra.mxu0 0.0
        %1042 = vmatprep.subr.mxu0 0.0
        %1043 = vmatpush1.msra.mxu0 0.0
        %1044 = vmatprep.subr.mxu0 0.0
        %1045 = vmatpush1.msra.mxu0 0.0
        %1046 = vmatprep.subr.mxu0 0.0
        %1047 = vmatpush1.msra.mxu0 0.0
        %1048 = vmatprep.subr.mxu0 0.0
        %1049 = vmatpush1.msra.mxu0 0.0
        %1050 = vmatprep.subr.mxu0 0.0
        %1051 = vmatpush1.msra.mxu0 0.0
        %1052 = vmatprep.subr.mxu0 0.0
        %1053 = vmatpush1.msra.mxu0 0.0
        %1054 = vmatprep.subr.mxu0 0.0
        %1055 = vmatpush1.msra.mxu0 0.0
        %1056 = vmatprep.subr.mxu0 0.0
        %1057 = vmatpush1.msra.mxu0 0.0
        %1058 = vmatprep.subr.mxu0 0.0
        %1059 = vmatpush1.msra.mxu0 0.0
        %1060 = vmatprep.subr.mxu0 0.0
        %1061 = vmatpush1.msra.mxu0 0.0
        %1062 = vmatprep.subr.mxu0 0.0
        %1063 = vmatpush1.msra.mxu0 0.0
        %1064 = vmatprep.mubr.f32.mxu0 0.0
        %1065 = vmatmul.mubr.f32.gmra.mrb[0].mxu0 %v998
        %v1066 = vpop.f32.mrb[0].mxu0
        %v1067 = vadd.f32 0.0, %v1066
        %v1068 = vpop.f32.mrb[0].mxu0
        %1069 = vdwg.mxu0
        %v1071 = vsel %vm522, %v918, 0
        %1073 = vmatprep.subr.mxu0 0.0
        %1074 = vmatpush1.msra.mxu0 %v511
        %1075 = vmatprep.subr.mxu0 0.0
        %1076 = vmatpush1.msra.mxu0 0.0
        %1077 = vmatprep.subr.mxu0 0.0
        %1078 = vmatpush1.msra.mxu0 0.0
        %1079 = vmatprep.subr.mxu0 0.0
        %1080 = vmatpush1.msra.mxu0 0.0
        %1081 = vmatprep.subr.mxu0 0.0
        %1082 = vmatpush1.msra.mxu0 0.0
        %1083 = vmatprep.subr.mxu0 0.0
        %1084 = vmatpush1.msra.mxu0 0.0
        %1085 = vmatprep.subr.mxu0 0.0
        %1086 = vmatpush1.msra.mxu0 0.0
        %1087 = vmatprep.subr.mxu0 0.0
        %1088 = vmatpush1.msra.mxu0 0.0
        %1089 = vmatprep.subr.mxu0 0.0
        %1090 = vmatpush1.msra.mxu0 0.0
        %1091 = vmatprep.subr.mxu0 0.0
        %1092 = vmatpush1.msra.mxu0 0.0
        %1093 = vmatprep.subr.mxu0 0.0
        %1094 = vmatpush1.msra.mxu0 0.0
        %1095 = vmatprep.subr.mxu0 0.0
        %1096 = vmatpush1.msra.mxu0 0.0
        %1097 = vmatprep.subr.mxu0 0.0
        %1098 = vmatpush1.msra.mxu0 0.0
        %1099 = vmatprep.subr.mxu0 0.0
        %1100 = vmatpush1.msra.mxu0 0.0
        %1101 = vmatprep.subr.mxu0 0.0
        %1102 = vmatpush1.msra.mxu0 0.0
        %1103 = vmatprep.subr.mxu0 0.0
        %1104 = vmatpush1.msra.mxu0 0.0
        %1105 = vmatprep.subr.mxu0 0.0
        %1106 = vmatpush1.msra.mxu0 0.0
        %1107 = vmatprep.subr.mxu0 0.0
        %1108 = vmatpush1.msra.mxu0 0.0
        %1109 = vmatprep.subr.mxu0 0.0
        %1110 = vmatpush1.msra.mxu0 0.0
        %1111 = vmatprep.subr.mxu0 0.0
        %1112 = vmatpush1.msra.mxu0 0.0
        %1113 = vmatprep.subr.mxu0 0.0
        %1114 = vmatpush1.msra.mxu0 0.0
        %1115 = vmatprep.subr.mxu0 0.0
        %1116 = vmatpush1.msra.mxu0 0.0
        %1117 = vmatprep.subr.mxu0 0.0
        %1118 = vmatpush1.msra.mxu0 0.0
        %1119 = vmatprep.subr.mxu0 0.0
        %1120 = vmatpush1.msra.mxu0 0.0
        %1121 = vmatprep.subr.mxu0 0.0
        %1122 = vmatpush1.msra.mxu0 0.0
        %1123 = vmatprep.subr.mxu0 0.0
        %1124 = vmatpush1.msra.mxu0 0.0
        %1125 = vmatprep.subr.mxu0 0.0
        %1126 = vmatpush1.msra.mxu0 0.0
        %1127 = vmatprep.subr.mxu0 0.0
        %1128 = vmatpush1.msra.mxu0 0.0
        %1129 = vmatprep.subr.mxu0 0.0
        %1130 = vmatpush1.msra.mxu0 0.0
        %1131 = vmatprep.subr.mxu0 0.0
        %1132 = vmatpush1.msra.mxu0 0.0
        %1133 = vmatprep.subr.mxu0 0.0
        %1134 = vmatpush1.msra.mxu0 0.0
        %1135 = vmatprep.subr.mxu0 0.0
        %1136 = vmatpush1.msra.mxu0 0.0
        %1137 = vmatprep.mubr.f32.mxu0 0.0
        %1138 = vmatmul.mubr.f32.gmra.mrb[0].mxu0 %v1071
        %v1139 = vpop.f32.mrb[0].mxu0
        %v1140 = vadd.f32 0.0, %v1139
        %v1141 = vpop.f32.mrb[0].mxu0
        %1142 = vdwg.mxu0
        %v1144 = vsel %vm522, %v919, 0
        %1146 = vmatprep.subr.mxu0 0.0
        %1147 = vmatpush1.msra.mxu0 %v512
        %1148 = vmatprep.subr.mxu0 0.0
        %1149 = vmatpush1.msra.mxu0 0.0
        %1150 = vmatprep.subr.mxu0 0.0
        %1151 = vmatpush1.msra.mxu0 0.0
        %1152 = vmatprep.subr.mxu0 0.0
        %1153 = vmatpush1.msra.mxu0 0.0
        %1154 = vmatprep.subr.mxu0 0.0
        %1155 = vmatpush1.msra.mxu0 0.0
        %1156 = vmatprep.subr.mxu0 0.0
        %1157 = vmatpush1.msra.mxu0 0.0
        %1158 = vmatprep.subr.mxu0 0.0
        %1159 = vmatpush1.msra.mxu0 0.0
        %1160 = vmatprep.subr.mxu0 0.0
        %1161 = vmatpush1.msra.mxu0 0.0
        %1162 = vmatprep.subr.mxu0 0.0
        %1163 = vmatpush1.msra.mxu0 0.0
        %1164 = vmatprep.subr.mxu0 0.0
        %1165 = vmatpush1.msra.mxu0 0.0
        %1166 = vmatprep.subr.mxu0 0.0
        %1167 = vmatpush1.msra.mxu0 0.0
        %1168 = vmatprep.subr.mxu0 0.0
        %1169 = vmatpush1.msra.mxu0 0.0
        %1170 = vmatprep.subr.mxu0 0.0
        %1171 = vmatpush1.msra.mxu0 0.0
        %1172 = vmatprep.subr.mxu0 0.0
        %1173 = vmatpush1.msra.mxu0 0.0
        %1174 = vmatprep.subr.mxu0 0.0
        %1175 = vmatpush1.msra.mxu0 0.0
        %1176 = vmatprep.subr.mxu0 0.0
        %1177 = vmatpush1.msra.mxu0 0.0
        %1178 = vmatprep.subr.mxu0 0.0
        %1179 = vmatpush1.msra.mxu0 0.0
        %1180 = vmatprep.subr.mxu0 0.0
        %1181 = vmatpush1.msra.mxu0 0.0
        %1182 = vmatprep.subr.mxu0 0.0
        %1183 = vmatpush1.msra.mxu0 0.0
        %1184 = vmatprep.subr.mxu0 0.0
        %1185 = vmatpush1.msra.mxu0 0.0
        %1186 = vmatprep.subr.mxu0 0.0
        %1187 = vmatpush1.msra.mxu0 0.0
        %1188 = vmatprep.subr.mxu0 0.0
        %1189 = vmatpush1.msra.mxu0 0.0
        %1190 = vmatprep.subr.mxu0 0.0
        %1191 = vmatpush1.msra.mxu0 0.0
        %1192 = vmatprep.subr.mxu0 0.0
        %1193 = vmatpush1.msra.mxu0 0.0
        %1194 = vmatprep.subr.mxu0 0.0
        %1195 = vmatpush1.msra.mxu0 0.0
        %1196 = vmatprep.subr.mxu0 0.0
        %1197 = vmatpush1.msra.mxu0 0.0
        %1198 = vmatprep.subr.mxu0 0.0
        %1199 = vmatpush1.msra.mxu0 0.0
        %1200 = vmatprep.subr.mxu0 0.0
        %1201 = vmatpush1.msra.mxu0 0.0
        %1202 = vmatprep.subr.mxu0 0.0
        %1203 = vmatpush1.msra.mxu0 0.0
        %1204 = vmatprep.subr.mxu0 0.0
        %1205 = vmatpush1.msra.mxu0 0.0
        %1206 = vmatprep.subr.mxu0 0.0
        %1207 = vmatpush1.msra.mxu0 0.0
        %1208 = vmatprep.subr.mxu0 0.0
        %1209 = vmatpush1.msra.mxu0 0.0
        %1210 = vmatprep.mubr.f32.mxu0 0.0
        %1211 = vmatmul.mubr.f32.gmra.mrb[0].mxu0 %v1144
        %v1212 = vpop.f32.mrb[0].mxu0
        %v1213 = vadd.f32 0.0, %v1212
        %v1214 = vpop.f32.mrb[0].mxu0
        %1215 = vdwg.mxu0
        %v1216 = vld [vmem:[%s6] sm:$0x1]
        %v1217 = vld [vmem:[#allocation11] sm:$0xff]
        %v1219 = vsel %vm522, %v994, 0
        %1221 = vmatprep.subr.mxu0 0.0
        %1222 = vmatpush1.msra.mxu0 %v1217
        %1223 = vmatprep.subr.mxu0 0.0
        %1224 = vmatpush1.msra.mxu0 0.0
        %1225 = vmatprep.subr.mxu0 0.0
        %1226 = vmatpush1.msra.mxu0 0.0
        %1227 = vmatprep.subr.mxu0 0.0
        %1228 = vmatpush1.msra.mxu0 0.0
        %1229 = vmatprep.subr.mxu0 0.0
        %1230 = vmatpush1.msra.mxu0 0.0
        %1231 = vmatprep.subr.mxu0 0.0
        %1232 = vmatpush1.msra.mxu0 0.0
        %1233 = vmatprep.subr.mxu0 0.0
        %1234 = vmatpush1.msra.mxu0 0.0
        %1235 = vmatprep.subr.mxu0 0.0
        %1236 = vmatpush1.msra.mxu0 0.0
        %1237 = vmatprep.subr.mxu0 0.0
        %1238 = vmatpush1.msra.mxu0 0.0
        %1239 = vmatprep.subr.mxu0 0.0
        %1240 = vmatpush1.msra.mxu0 0.0
        %1241 = vmatprep.subr.mxu0 0.0
        %1242 = vmatpush1.msra.mxu0 0.0
        %1243 = vmatprep.subr.mxu0 0.0
        %1244 = vmatpush1.msra.mxu0 0.0
        %1245 = vmatprep.subr.mxu0 0.0
        %1246 = vmatpush1.msra.mxu0 0.0
        %1247 = vmatprep.subr.mxu0 0.0
        %1248 = vmatpush1.msra.mxu0 0.0
        %1249 = vmatprep.subr.mxu0 0.0
        %1250 = vmatpush1.msra.mxu0 0.0
        %1251 = vmatprep.subr.mxu0 0.0
        %1252 = vmatpush1.msra.mxu0 0.0
        %1253 = vmatprep.subr.mxu0 0.0
        %1254 = vmatpush1.msra.mxu0 0.0
        %1255 = vmatprep.subr.mxu0 0.0
        %1256 = vmatpush1.msra.mxu0 0.0
        %1257 = vmatprep.subr.mxu0 0.0
        %1258 = vmatpush1.msra.mxu0 0.0
        %1259 = vmatprep.subr.mxu0 0.0
        %1260 = vmatpush1.msra.mxu0 0.0
        %1261 = vmatprep.subr.mxu0 0.0
        %1262 = vmatpush1.msra.mxu0 0.0
        %1263 = vmatprep.subr.mxu0 0.0
        %1264 = vmatpush1.msra.mxu0 0.0
        %1265 = vmatprep.subr.mxu0 0.0
        %1266 = vmatpush1.msra.mxu0 0.0
        %1267 = vmatprep.subr.mxu0 0.0
        %1268 = vmatpush1.msra.mxu0 0.0
        %1269 = vmatprep.subr.mxu0 0.0
        %1270 = vmatpush1.msra.mxu0 0.0
        %1271 = vmatprep.subr.mxu0 0.0
        %1272 = vmatpush1.msra.mxu0 0.0
        %1273 = vmatprep.subr.mxu0 0.0
        %1274 = vmatpush1.msra.mxu0 0.0
        %1275 = vmatprep.subr.mxu0 0.0
        %1276 = vmatpush1.msra.mxu0 0.0
        %1277 = vmatprep.subr.mxu0 0.0
        %1278 = vmatpush1.msra.mxu0 0.0
        %1279 = vmatprep.subr.mxu0 0.0
        %1280 = vmatpush1.msra.mxu0 0.0
        %1281 = vmatprep.subr.mxu0 0.0
        %1282 = vmatpush1.msra.mxu0 0.0
        %1283 = vmatprep.subr.mxu0 0.0
        %1284 = vmatpush1.msra.mxu0 0.0
        %1285 = vmatprep.mubr.f32.mxu0 0.0
        %1286 = vmatmul.mubr.f32.gmra.mrb[0].mxu0 %v1219
        %v1287 = vpop.f32.mrb[0].mxu0
        %v1288 = vadd.f32 0.0, %v1287
        %v1289 = vpop.f32.mrb[0].mxu0
        %1290 = vdwg.mxu0
        %v1292 = vlaneseq
        %v1293 = vshrl.u32 %v1292, 7
        %v1294 = vsub.s32 0, %v1293
        %v1295 = vrot.slane %v1216, %v1294
        %v1297 = vadd.f32 %v1295, %v1288
        %v1298 = vld [vmem:[#allocation11 + $0x8] sm:$0xff]
        %v1300 = vsel %vm522, %v1067, 0
        %1302 = vmatprep.subr.mxu0 0.0
        %1303 = vmatpush1.msra.mxu0 %v1298
        %1304 = vmatprep.subr.mxu0 0.0
        %1305 = vmatpush1.msra.mxu0 0.0
        %1306 = vmatprep.subr.mxu0 0.0
        %1307 = vmatpush1.msra.mxu0 0.0
        %1308 = vmatprep.subr.mxu0 0.0
        %1309 = vmatpush1.msra.mxu0 0.0
        %1310 = vmatprep.subr.mxu0 0.0
        %1311 = vmatpush1.msra.mxu0 0.0
        %1312 = vmatprep.subr.mxu0 0.0
        %1313 = vmatpush1.msra.mxu0 0.0
        %1314 = vmatprep.subr.mxu0 0.0
        %1315 = vmatpush1.msra.mxu0 0.0
        %1316 = vmatprep.subr.mxu0 0.0
        %1317 = vmatpush1.msra.mxu0 0.0
        %1318 = vmatprep.subr.mxu0 0.0
        %1319 = vmatpush1.msra.mxu0 0.0
        %1320 = vmatprep.subr.mxu0 0.0
        %1321 = vmatpush1.msra.mxu0 0.0
        %1322 = vmatprep.subr.mxu0 0.0
        %1323 = vmatpush1.msra.mxu0 0.0
        %1324 = vmatprep.subr.mxu0 0.0
        %1325 = vmatpush1.msra.mxu0 0.0
        %1326 = vmatprep.subr.mxu0 0.0
        %1327 = vmatpush1.msra.mxu0 0.0
        %1328 = vmatprep.subr.mxu0 0.0
        %1329 = vmatpush1.msra.mxu0 0.0
        %1330 = vmatprep.subr.mxu0 0.0
        %1331 = vmatpush1.msra.mxu0 0.0
        %1332 = vmatprep.subr.mxu0 0.0
        %1333 = vmatpush1.msra.mxu0 0.0
        %1334 = vmatprep.subr.mxu0 0.0
        %1335 = vmatpush1.msra.mxu0 0.0
        %1336 = vmatprep.subr.mxu0 0.0
        %1337 = vmatpush1.msra.mxu0 0.0
        %1338 = vmatprep.subr.mxu0 0.0
        %1339 = vmatpush1.msra.mxu0 0.0
        %1340 = vmatprep.subr.mxu0 0.0
        %1341 = vmatpush1.msra.mxu0 0.0
        %1342 = vmatprep.subr.mxu0 0.0
        %1343 = vmatpush1.msra.mxu0 0.0
        %1344 = vmatprep.subr.mxu0 0.0
        %1345 = vmatpush1.msra.mxu0 0.0
        %1346 = vmatprep.subr.mxu0 0.0
        %1347 = vmatpush1.msra.mxu0 0.0
        %1348 = vmatprep.subr.mxu0 0.0
        %1349 = vmatpush1.msra.mxu0 0.0
        %1350 = vmatprep.subr.mxu0 0.0
        %1351 = vmatpush1.msra.mxu0 0.0
        %1352 = vmatprep.subr.mxu0 0.0
        %1353 = vmatpush1.msra.mxu0 0.0
        %1354 = vmatprep.subr.mxu0 0.0
        %1355 = vmatpush1.msra.mxu0 0.0
        %1356 = vmatprep.subr.mxu0 0.0
        %1357 = vmatpush1.msra.mxu0 0.0
        %1358 = vmatprep.subr.mxu0 0.0
        %1359 = vmatpush1.msra.mxu0 0.0
        %1360 = vmatprep.subr.mxu0 0.0
        %1361 = vmatpush1.msra.mxu0 0.0
        %1362 = vmatprep.subr.mxu0 0.0
        %1363 = vmatpush1.msra.mxu0 0.0
        %1364 = vmatprep.subr.mxu0 0.0
        %1365 = vmatpush1.msra.mxu0 0.0
        %1366 = vmatprep.mubr.f32.mxu0 0.0
        %1367 = vmatmul.mubr.f32.gmra.mrb[0].mxu0 %v1300
        %v1368 = vpop.f32.mrb[0].mxu0
        %v1369 = vadd.f32 0.0, %v1368
        %v1370 = vpop.f32.mrb[0].mxu0
        %1371 = vdwg.mxu0
        %v1372 = vadd.f32 %v1297, %v1369
        %v1373 = vld [vmem:[#allocation11 + $0x10] sm:$0xff]
        %v1375 = vsel %vm522, %v1140, 0
        %1377 = vmatprep.subr.mxu0 0.0
        %1378 = vmatpush1.msra.mxu0 %v1373
        %1379 = vmatprep.subr.mxu0 0.0
        %1380 = vmatpush1.msra.mxu0 0.0
        %1381 = vmatprep.subr.mxu0 0.0
        %1382 = vmatpush1.msra.mxu0 0.0
        %1383 = vmatprep.subr.mxu0 0.0
        %1384 = vmatpush1.msra.mxu0 0.0
        %1385 = vmatprep.subr.mxu0 0.0
        %1386 = vmatpush1.msra.mxu0 0.0
        %1387 = vmatprep.subr.mxu0 0.0
        %1388 = vmatpush1.msra.mxu0 0.0
        %1389 = vmatprep.subr.mxu0 0.0
        %1390 = vmatpush1.msra.mxu0 0.0
        %1391 = vmatprep.subr.mxu0 0.0
        %1392 = vmatpush1.msra.mxu0 0.0
        %1393 = vmatprep.subr.mxu0 0.0
        %1394 = vmatpush1.msra.mxu0 0.0
        %1395 = vmatprep.subr.mxu0 0.0
        %1396 = vmatpush1.msra.mxu0 0.0
        %1397 = vmatprep.subr.mxu0 0.0
        %1398 = vmatpush1.msra.mxu0 0.0
        %1399 = vmatprep.subr.mxu0 0.0
        %1400 = vmatpush1.msra.mxu0 0.0
        %1401 = vmatprep.subr.mxu0 0.0
        %1402 = vmatpush1.msra.mxu0 0.0
        %1403 = vmatprep.subr.mxu0 0.0
        %1404 = vmatpush1.msra.mxu0 0.0
        %1405 = vmatprep.subr.mxu0 0.0
        %1406 = vmatpush1.msra.mxu0 0.0
        %1407 = vmatprep.subr.mxu0 0.0
        %1408 = vmatpush1.msra.mxu0 0.0
        %1409 = vmatprep.subr.mxu0 0.0
        %1410 = vmatpush1.msra.mxu0 0.0
        %1411 = vmatprep.subr.mxu0 0.0
        %1412 = vmatpush1.msra.mxu0 0.0
        %1413 = vmatprep.subr.mxu0 0.0
        %1414 = vmatpush1.msra.mxu0 0.0
        %1415 = vmatprep.subr.mxu0 0.0
        %1416 = vmatpush1.msra.mxu0 0.0
        %1417 = vmatprep.subr.mxu0 0.0
        %1418 = vmatpush1.msra.mxu0 0.0
        %1419 = vmatprep.subr.mxu0 0.0
        %1420 = vmatpush1.msra.mxu0 0.0
        %1421 = vmatprep.subr.mxu0 0.0
        %1422 = vmatpush1.msra.mxu0 0.0
        %1423 = vmatprep.subr.mxu0 0.0
        %1424 = vmatpush1.msra.mxu0 0.0
        %1425 = vmatprep.subr.mxu0 0.0
        %1426 = vmatpush1.msra.mxu0 0.0
        %1427 = vmatprep.subr.mxu0 0.0
        %1428 = vmatpush1.msra.mxu0 0.0
        %1429 = vmatprep.subr.mxu0 0.0
        %1430 = vmatpush1.msra.mxu0 0.0
        %1431 = vmatprep.subr.mxu0 0.0
        %1432 = vmatpush1.msra.mxu0 0.0
        %1433 = vmatprep.subr.mxu0 0.0
        %1434 = vmatpush1.msra.mxu0 0.0
        %1435 = vmatprep.subr.mxu0 0.0
        %1436 = vmatpush1.msra.mxu0 0.0
        %1437 = vmatprep.subr.mxu0 0.0
        %1438 = vmatpush1.msra.mxu0 0.0
        %1439 = vmatprep.subr.mxu0 0.0
        %1440 = vmatpush1.msra.mxu0 0.0
        %1441 = vmatprep.mubr.f32.mxu0 0.0
        %1442 = vmatmul.mubr.f32.gmra.mrb[0].mxu0 %v1375
        %v1443 = vpop.f32.mrb[0].mxu0
        %v1444 = vadd.f32 0.0, %v1443
        %v1445 = vpop.f32.mrb[0].mxu0
        %1446 = vdwg.mxu0
        %v1447 = vadd.f32 %v1372, %v1444
        %v1448 = vld [vmem:[#allocation11 + $0x18] sm:$0xff]
        %v1450 = vsel %vm522, %v1213, 0
        %1452 = vmatprep.subr.mxu0 0.0
        %1453 = vmatpush1.msra.mxu0 %v1448
        %1454 = vmatprep.subr.mxu0 0.0
        %1455 = vmatpush1.msra.mxu0 0.0
        %1456 = vmatprep.subr.mxu0 0.0
        %1457 = vmatpush1.msra.mxu0 0.0
        %1458 = vmatprep.subr.mxu0 0.0
        %1459 = vmatpush1.msra.mxu0 0.0
        %1460 = vmatprep.subr.mxu0 0.0
        %1461 = vmatpush1.msra.mxu0 0.0
        %1462 = vmatprep.subr.mxu0 0.0
        %1463 = vmatpush1.msra.mxu0 0.0
        %1464 = vmatprep.subr.mxu0 0.0
        %1465 = vmatpush1.msra.mxu0 0.0
        %1466 = vmatprep.subr.mxu0 0.0
        %1467 = vmatpush1.msra.mxu0 0.0
        %1468 = vmatprep.subr.mxu0 0.0
        %1469 = vmatpush1.msra.mxu0 0.0
        %1470 = vmatprep.subr.mxu0 0.0
        %1471 = vmatpush1.msra.mxu0 0.0
        %1472 = vmatprep.subr.mxu0 0.0
        %1473 = vmatpush1.msra.mxu0 0.0
        %1474 = vmatprep.subr.mxu0 0.0
        %1475 = vmatpush1.msra.mxu0 0.0
        %1476 = vmatprep.subr.mxu0 0.0
        %1477 = vmatpush1.msra.mxu0 0.0
        %1478 = vmatprep.subr.mxu0 0.0
        %1479 = vmatpush1.msra.mxu0 0.0
        %1480 = vmatprep.subr.mxu0 0.0
        %1481 = vmatpush1.msra.mxu0 0.0
        %1482 = vmatprep.subr.mxu0 0.0
        %1483 = vmatpush1.msra.mxu0 0.0
        %1484 = vmatprep.subr.mxu0 0.0
        %1485 = vmatpush1.msra.mxu0 0.0
        %1486 = vmatprep.subr.mxu0 0.0
        %1487 = vmatpush1.msra.mxu0 0.0
        %1488 = vmatprep.subr.mxu0 0.0
        %1489 = vmatpush1.msra.mxu0 0.0
        %1490 = vmatprep.subr.mxu0 0.0
        %1491 = vmatpush1.msra.mxu0 0.0
        %1492 = vmatprep.subr.mxu0 0.0
        %1493 = vmatpush1.msra.mxu0 0.0
        %1494 = vmatprep.subr.mxu0 0.0
        %1495 = vmatpush1.msra.mxu0 0.0
        %1496 = vmatprep.subr.mxu0 0.0
        %1497 = vmatpush1.msra.mxu0 0.0
        %1498 = vmatprep.subr.mxu0 0.0
        %1499 = vmatpush1.msra.mxu0 0.0
        %1500 = vmatprep.subr.mxu0 0.0
        %1501 = vmatpush1.msra.mxu0 0.0
        %1502 = vmatprep.subr.mxu0 0.0
        %1503 = vmatpush1.msra.mxu0 0.0
        %1504 = vmatprep.subr.mxu0 0.0
        %1505 = vmatpush1.msra.mxu0 0.0
        %1506 = vmatprep.subr.mxu0 0.0
        %1507 = vmatpush1.msra.mxu0 0.0
        %1508 = vmatprep.subr.mxu0 0.0
        %1509 = vmatpush1.msra.mxu0 0.0
        %1510 = vmatprep.subr.mxu0 0.0
        %1511 = vmatpush1.msra.mxu0 0.0
        %1512 = vmatprep.subr.mxu0 0.0
        %1513 = vmatpush1.msra.mxu0 0.0
        %1514 = vmatprep.subr.mxu0 0.0
        %1515 = vmatpush1.msra.mxu0 0.0
        %1516 = vmatprep.mubr.f32.mxu0 0.0
        %1517 = vmatmul.mubr.f32.gmra.mrb[0].mxu0 %v1450
        %v1518 = vpop.f32.mrb[0].mxu0
        %v1519 = vadd.f32 0.0, %v1518
        %v1520 = vpop.f32.mrb[0].mxu0
        %1521 = vdwg.mxu0
        %v1522 = vadd.f32 %v1447, %v1519
        %vm1523 = vcmask 261120
        %1524 = vst.msk [vmem:[%s493] sm:$0xff] %vm1523, %v1522
        %s1525 = sand.u32 %s216, 1
        %s1526 = scalar_lea.sflag [#allocation4], %s1525
        %s1527 = sand.u32 %s216, 1
        %s1528 = smul.addr %s1527, 8
        %s1529 = scalar_lea.vmem [#allocation13], %s1528
        %s1530 = sand.u32 %s242, 1
        %s1531 = scalar_lea.sflag [#allocation15], %s1530
        %s1532 = sand.u32 %s242, 1
        %s1533 = smul.addr %s1532, 32
        %s1534 = scalar_lea.vmem [#allocation14], %s1533
        // Predicated region
        $region73: #{tpu_custom_call.1} parent=47 // pred_check
          %p1535 = pneg %p226
        $region74: #{tpu_custom_call.1} parent=47 // pred_check_branch
          %1537 = sbr.rel (%p1535) target = $region76
        $region75: #{tpu_custom_call.1} parent=47 // pred_region
          %s1539 = ssub.s32 128, 128
          %1540 = vsyncadd %s1526, %s1539
          %s1541 = smul.addr %s36, 128
          %s1542 = scalar_lea.hbm %s7, %s1541
          %s1544 = sshll.u32 %s1529, 4
          %s1545 = int_to_ptr.vmem [resolvable:$true] %s1544
          %1547 = dma.vmem_to_hbm [thread:$0]  %s1545, 128, %s1542, %s1526
        $region76: #{tpu_custom_call.1} parent=47 // pred_fallthru
          _
        // Predicated region
        $region77: #{tpu_custom_call.1} parent=47 // pred_check
          %p1548 = pneg %p252
        $region78: #{tpu_custom_call.1} parent=47 // pred_check_branch
          %1550 = sbr.rel (%p1548) target = $region80
        $region79: #{tpu_custom_call.1} parent=47 // pred_region
          %s1552 = ssub.s32 512, 512
          %1553 = vsyncadd %s1531, %s1552
          %s1554 = smul.addr %s36, 4
          %s1555 = smul.addr %s1554, 128
          %s1556 = scalar_lea.hbm %s8, %s1555
          %s1557 = sshll.u32 %s1534, 4
          %s1558 = int_to_ptr.vmem [resolvable:$true] %s1557
          %1563 = dma.vmem_to_hbm [thread:$0]  %s1558, 512, %s1556, %s1531, 128, 128, 8
        $region80: #{tpu_custom_call.1} parent=47 // pred_fallthru
          _
      $region48: #{tpu_custom_call.1} parent=5 // pred_fallthru
        _
      %p1564 = scmp.le.s32.totalorder 2, %s31
      // Predicated region
      $region81: #{tpu_custom_call.1} parent=5 // pred_check
        %p1565 = pneg %p1564
      $region82: #{tpu_custom_call.1} parent=5 // pred_check_branch
        %1567 = sbr.rel (%p1565) target = $region84
      $region83: #{tpu_custom_call.1} parent=5 // pred_region
        %s1568 = ssub.s32 %s31, 2
        // Predicated region
        $region85: #{tpu_custom_call.1} parent=83 // pred_check
          %p1569 = pneg %p232
        $region86: #{tpu_custom_call.1} parent=83 // pred_check_branch
          %1571 = sbr.rel (%p1569) target = $region88
        $region87: #{tpu_custom_call.1} parent=83 // pred_region
          %s1572 = sand.u32 %s217, 1
          %s1573 = scalar_lea.sflag [#allocation4], %s1572
          %s1574 = sand.u32 %s217, 1
          %s1575 = smul.addr %s1574, 8
          %s1576 = scalar_lea.vmem [#allocation13], %s1575
          %1577 = dma.done %s1573, 128
        $region88: #{tpu_custom_call.1} parent=83 // pred_fallthru
          _
        // Predicated region
        $region89: #{tpu_custom_call.1} parent=83 // pred_check
          %p1578 = pneg %p258
        $region90: #{tpu_custom_call.1} parent=83 // pred_check_branch
          %1580 = sbr.rel (%p1578) target = $region92
        $region91: #{tpu_custom_call.1} parent=83 // pred_region
          %s1581 = sand.u32 %s243, 1
          %s1582 = scalar_lea.sflag [#allocation15], %s1581
          %s1583 = sand.u32 %s243, 1
          %s1584 = smul.addr %s1583, 32
          %s1585 = scalar_lea.vmem [#allocation14], %s1584
          %1586 = dma.done %s1582, 512
        $region92: #{tpu_custom_call.1} parent=83 // pred_fallthru
          _
      $region84: #{tpu_custom_call.1} parent=5 // pred_fallthru
        _
    $region6: #{tpu_custom_call.1} parent=1 // loop_footer
      %s35 = sadd.s32 1, %s31
    $region7: #{tpu_custom_call.1} parent=1 // loop_footer_branch
      %30 = sbr.rel target = $region3
    $region8: #{tpu_custom_call.1} parent=1 // loop_exit
      _
    %1587 = vsyncpa [#allocation3], 1
    %s1588 = scalar_lea.sflag [#allocation3], 1
    %1589 = vsyncpa %s1588, 1
    %1590 = vsyncpa [#allocation6], 1
    %s1591 = scalar_lea.sflag [#allocation6], 1
    %1592 = vsyncpa %s1591, 1
    %1593 = vsyncpa [#allocation9], 1
    %s1594 = scalar_lea.sflag [#allocation9], 1
    %1595 = vsyncpa %s1594, 1
    %1596 = vsyncpa [#allocation12], 1
    %1597 = vsyncpa [#allocation4], 1
    %s1598 = scalar_lea.sflag [#allocation4], 1
    %1599 = vsyncpa %s1598, 1
    %1600 = vsyncpa [#allocation15], 1
    %s1601 = scalar_lea.sflag [#allocation15], 1
    %1602 = vsyncpa %s1601, 1

</llo_original>
